<compile_context>
chip_gen: v7x
topology: tpu7x:2x2x1
jax: 0.10.0
libtpu: 0.0.40
codegen_flags: <defaults>
</compile_context>

<pallas_src>
import numpy as np
import jax
import jax.numpy as jnp
from jax import lax
from jax.experimental import pallas as pl
from jax.experimental.pallas import tpu as pltpu

# ---------------- model constants ----------------
DIM = 32
NUM_HEADS = 4
GROUPING = 2
P = 3
NUM_KV_HEADS = NUM_HEADS // GROUPING          # 2
HEAD_DIM = DIM // NUM_HEADS                   # 8
C_KV = DIM // GROUPING                        # 16 == NUM_KV_HEADS * HEAD_DIM

B = 2
LATENT = 8
SEQ = LATENT * LATENT                         # N = 64 (perfect square)
BN = B * SEQ                                  # fused rows = 128
QKV = DIM + 2 * C_KV                          # fused q/k/v projection width = 64
NSC = NUM_HEADS + NUM_KV_HEADS                # per-batch head-norm count = 6
PAD = 16                                      # sublane-aligned halo (>= max conv shift of 9)

TAPS = tuple((dy, dx) for dy in (-1, 0, 1) for dx in (-1, 0, 1))   # 3x3 taps, dy-major


# ---------------- host-side constants ----------------
def _conv_tap_weight_masks(dwc_w):
    """(9, BN, C_kv) tiles = (valid-neighbour mask) x (per-channel conv weight) per tap.
    Masks also zero any row whose shift crosses the latent-grid / batch boundary."""
    rows = np.arange(BN)
    i = (rows % SEQ) // LATENT
    j = rows % LATENT
    w_flat = np.asarray(dwc_w, np.float32).reshape(C_KV, 9).T            # (9, 16) tap-major
    tiles = []
    for t, (dy, dx) in enumerate(TAPS):
        ok = ((i + dy >= 0) & (i + dy < LATENT) & (j + dx >= 0) & (j + dx < LATENT))
        tiles.append(ok.astype(np.float32)[:, None] * w_flat[t][None, :])
    return np.stack(tiles)                                               # (9, BN, 16)


def _selector_constants():
    """0/1 selector matrices that keep the focused() norms / GQA head repeat on the MXU."""
    bsel = np.zeros((B, BN), np.float32)                  # batch-row selector
    for b in range(B):
        bsel[b, b * SEQ:(b + 1) * SEQ] = 1.0
    hsel = np.zeros((QKV, NSC), np.float32)               # lane -> (q-head | k-head) selector
    for h in range(NUM_HEADS):
        hsel[h * HEAD_DIM:(h + 1) * HEAD_DIM, h] = 1.0
    for g in range(NUM_KV_HEADS):
        hsel[DIM + g * HEAD_DIM:DIM + (g + 1) * HEAD_DIM, NUM_HEADS + g] = 1.0
    # merged q/k scale broadcast: scl @ bqk -> [q-scale per lane | k-scale per lane]
    bqk = np.zeros((NSC, 2 * DIM), np.float32)
    for h in range(NUM_HEADS):
        bqk[h, h * HEAD_DIM:(h + 1) * HEAD_DIM] = 1.0
        bqk[NUM_HEADS + h % NUM_KV_HEADS, DIM + h * HEAD_DIM:DIM + (h + 1) * HEAD_DIM] = 1.0
    mbd = np.zeros((DIM, DIM), np.float32)                # per-head block-diagonal mask
    for h in range(NUM_HEADS):
        mbd[h * HEAD_DIM:(h + 1) * HEAD_DIM, h * HEAD_DIM:(h + 1) * HEAD_DIM] = 1.0
    rep = np.zeros((C_KV, DIM), np.float32)               # kv-head -> q-head repeat expansion
    for h in range(NUM_HEADS):
        g = h % NUM_KV_HEADS
        rep[g * HEAD_DIM:(g + 1) * HEAD_DIM, h * HEAD_DIM:(h + 1) * HEAD_DIM] = np.eye(
            HEAD_DIM, dtype=np.float32)
    return bsel, hsel, bqk, mbd, rep


# ---------------- Pallas kernel ----------------
def fgqa_kernel(x_ref, wcat_ref, bcat_ref, mw_ref, bsel_ref, hsel_ref, bqk_ref,
                mbd_ref, projt_ref, projdwc_ref, projb_ref, o_ref, pad_ref):
    # fused q/k/v projection: one (BN, C) @ (C, C + 2*C_kv) MXU matmul (bf16 in, f32 acc)
    a = jnp.dot(x_ref[...], wcat_ref[...],
                preferred_element_type=jnp.float32) + bcat_ref[...]              # (BN, 64)

    # focused(): relu and relu^p element-wise on the whole fused tile (VPU)
    zr = jnp.maximum(a, 0.0)
    zr2 = zr * zr
    zp = zr2 * zr                                                                # relu(z)^3
    zp2 = zp * zp

    qp = zp[:, :DIM]                        # (BN, 32) unscaled focused-q numerator
    kp = zp[:, DIM:DIM + C_KV]              # (BN, 16) unscaled focused-k numerator
    v = a[:, DIM + C_KV:]                   # (BN, 16)

    # per-(batch, head) Frobenius norms via selector matmuls (MXU) + sqrt/rsqrt (EUP)
    per_batch_r = jnp.dot(bsel_ref[...], zr2, preferred_element_type=jnp.float32)   # (B, 64)
    per_batch_p = jnp.dot(bsel_ref[...], zp2, preferred_element_type=jnp.float32)   # (B, 64)
    sr = jnp.dot(per_batch_r, hsel_ref[...], preferred_element_type=jnp.float32)    # (B, 6)
    sp = jnp.dot(per_batch_p, hsel_ref[...], preferred_element_type=jnp.float32)    # (B, 6)
    scl = jnp.sqrt(sr) * lax.rsqrt(sp)      # ||relu(z)||_F / ||relu(z)^p||_F per head
    qk = jnp.dot(scl, bqk_ref[...], preferred_element_type=jnp.float32)             # (B, 64)
    # cscale[b, h*8+i] = scl_q[b, h] * scl_k[b, h % num_kv_heads]
    cscale = qk[:, :DIM] * qk[:, DIM:]                                              # (B, 32)

    # depthwise 3x3 conv over the LxL grid: zero-padded VMEM scratch + 8 static sublane-shifted
    # slices, accumulated against host-precomputed (edge-mask x per-channel-weight) tiles.
    pad_ref[...] = jnp.zeros_like(pad_ref)
    pad_ref[PAD:PAD + BN, :] = v
    v_dwc = v * mw_ref[4]                                          # centre tap
    for t, (dy, dx) in enumerate(TAPS):
        if dy == 0 and dx == 0:
            continue
        d = dy * LATENT + dx
        v_dwc = v_dwc + pad_ref[PAD + d:PAD + d + BN, :] * mw_ref[t]

    # per-batch GQA: kv = focused(k)^T v as one (16,16) contraction, expanded to a scaled
    # block-diagonal (32,32) so all 4 query heads are a single matmul per batch.
    qp16 = qp.astype(jnp.bfloat16)
    mbd = mbd_ref[...]
    attn_parts = []
    for b in range(B):
        r0, r1 = b * SEQ, (b + 1) * SEQ
        kvb = lax.dot_general(kp[r0:r1], v[r0:r1], (((0,), (0,)), ((), ())),
                              preferred_element_type=jnp.float32)                # (16, 16)
        kv_tiled = jnp.concatenate([kvb, kvb], axis=1)                           # (16, 32)
        kv_tiled = jnp.concatenate([kv_tiled, kv_tiled], axis=0)                 # (32, 32)
        kvs = kv_tiled * (mbd * cscale[b:b + 1, :])      # block-diag, all scales folded in
        attn_parts.append(jnp.dot(qp16[r0:r1], kvs.astype(jnp.bfloat16),
                                  preferred_element_type=jnp.float32))           # (64, 32)
    attn = jnp.concatenate(attn_parts, axis=0)                                   # (BN, 32)

    # output projection; the GQA head-repeat of v_dwc is pre-folded into projdwc (16,32)
    out = (jnp.dot(attn.astype(jnp.bfloat16), projt_ref[...],
                   preferred_element_type=jnp.float32) +
           jnp.dot(v_dwc.astype(jnp.bfloat16), projdwc_ref[...],
                   preferred_element_type=jnp.float32) +
           projb_ref[...])
    o_ref[...] = out


# ---------------- glue / wrapper ----------------
def _full_spec(arr):
    zeros = (0,) * arr.ndim
    return pl.BlockSpec(arr.shape, lambda i, _z=zeros: _z)


def fgqa_pallas(x, params):
    Bx, N, C = x.shape
    assert (Bx, N, C) == (B, SEQ, DIM)

    bsel, hsel, bqk, mbd, rep = _selector_constants()

    # host-side operand packing (layout / static weight re-association only)
    x_f = x.reshape(BN, C).astype(jnp.bfloat16)
    w_cat = jnp.concatenate([params['wq_w'].T, params['wkv_w'].T], axis=1).astype(jnp.bfloat16)
    b_cat = jnp.concatenate([params['wq_b'], params['wkv_b']]).reshape(1, QKV)
    proj_t = params['proj_w'].T.astype(jnp.bfloat16)
    proj_dwc_f32 = jnp.asarray(rep) @ params['proj_w'].T                  # (16, 32)
    proj_dwc = proj_dwc_f32.astype(jnp.bfloat16)
    # dwc bias is a per-row constant after head-repeat + proj -> fold into the proj bias
    proj_b = (params['proj_b'] + params['dwc_b'] @ proj_dwc_f32).reshape(1, C)
    mw = jnp.asarray(_conv_tap_weight_masks(params['dwc_w']))             # (9, BN, 16)

    operands = (x_f, w_cat, b_cat, mw, jnp.asarray(bsel), jnp.asarray(hsel),
                jnp.asarray(bqk), jnp.asarray(mbd), proj_t, proj_dwc, proj_b)

    grid_spec = pltpu.PrefetchScalarGridSpec(
        num_scalar_prefetch=0,
        grid=(1,),                       # batch fused into one invocation; all operands < 200 KB
        in_specs=[_full_spec(a) for a in operands],
        out_specs=pl.BlockSpec((BN, C), lambda i: (0, 0)),
        scratch_shapes=[pltpu.VMEM((PAD + BN + PAD, C_KV), jnp.float32)],
    )
    out = pl.pallas_call(
        fgqa_kernel,
        out_shape=jax.ShapeDtypeStruct((BN, C), jnp.float32),
        grid_spec=grid_spec,
        # B=2 is fused onto one TensorCore; for large B reintroduce a ("parallel",) batch grid
        # so v7x's two TensorCores can split it.
        compiler_params=pltpu.CompilerParams(dimension_semantics=("arbitrary",)),
    )(*operands)
    return out.reshape(Bx, N, C)


# ---------------- pure-JAX reference (mirrors the PyTorch forward) ----------------
def fgqa_reference(x, params):
    Bx, N, C = x.shape
    hp = lax.Precision.HIGHEST
    q = x @ params['wq_w'].T + params['wq_b']
    q = q.reshape(Bx, N, NUM_HEADS, HEAD_DIM).transpose(0, 2, 1, 3)
    kv = x @ params['wkv_w'].T + params['wkv_b']
    kv = kv.reshape(Bx, N, 2, NUM_KV_HEADS, HEAD_DIM).transpose(2, 0, 3, 1, 4)
    k, v = kv[0], kv[1]

    def focused(z):
        zr = jnp.maximum(z, 0.0)
        zp = zr ** P
        zn = jnp.sqrt(jnp.sum(zr ** 2, axis=(-2, -1), keepdims=True))
        zpn = jnp.sqrt(jnp.sum(zp ** 2, axis=(-2, -1), keepdims=True))
        return zn / zpn * zp

    q = focused(q)
    k = focused(k)
    kvm = jnp.einsum('bgnd,bgne->bgde', k, v, precision=hp)
    attn = jnp.einsum('bhnd,bhde->bhne', q, jnp.tile(kvm, (1, GROUPING, 1, 1)), precision=hp)

    sq_v = v.transpose(0, 1, 3, 2).reshape(Bx, C_KV, LATENT, LATENT)
    v_dwc = lax.conv_general_dilated(
        sq_v, params['dwc_w'], (1, 1), ((1, 1), (1, 1)),
        feature_group_count=C_KV,
        dimension_numbers=('NCHW', 'OIHW', 'NCHW'), precision=hp)
    v_dwc = v_dwc + params['dwc_b'][None, :, None, None]
    v_dwc = v_dwc.reshape(Bx, NUM_KV_HEADS, HEAD_DIM, N).transpose(0, 1, 3, 2)

    out = attn + jnp.tile(v_dwc, (1, GROUPING, 1, 1))
    out = out.transpose(0, 2, 1, 3).reshape(Bx, N, C)
    return out @ params['proj_w'].T + params['proj_b']


if __name__ == "__main__":
    key = jax.random.PRNGKey(0)
    keys = jax.random.split(key, 9)
    params = {
        'wq_w':  jax.random.normal(keys[0], (DIM, DIM), jnp.float32) * 0.08,
        'wq_b':  jax.random.normal(keys[1], (DIM,), jnp.float32) * 0.02,
        'wkv_w': jax.random.normal(keys[2], (2 * C_KV, DIM), jnp.float32) * 0.08,
        'wkv_b': jax.random.normal(keys[3], (2 * C_KV,), jnp.float32) * 0.02,
        'dwc_w': jax.random.normal(keys[4], (C_KV, 1, 3, 3), jnp.float32) * 0.10,
        'dwc_b': jax.random.normal(keys[5], (C_KV,), jnp.float32) * 0.02,
        'proj_w': jax.random.normal(keys[6], (DIM, DIM), jnp.float32) * 0.08,
        'proj_b': jax.random.normal(keys[7], (DIM,), jnp.float32) * 0.02,
    }
    x = jax.random.normal(keys[8], (B, SEQ, DIM), jnp.float32)

    out = jax.block_until_ready(fgqa_pallas(x, params))
    ref = jax.block_until_ready(fgqa_reference(x, params))
    assert out.shape == (B, SEQ, DIM)
    # bf16 MXU operands (f32 accumulation) inside the kernel -> compare at 2e-2.
    np.testing.assert_allclose(np.asarray(out), np.asarray(ref), rtol=2e-2, atol=2e-2)
    print("KERNEL_OK")
</pallas_src>

<mosaic_0001>
module attributes {stable_mosaic.version = 11 : i64} {
  func.func @fgqa_kernel(%arg0: i32, %arg1: memref<128x32xbf16, #tpu.memory_space<vmem>>, %arg2: memref<32x64xbf16, #tpu.memory_space<vmem>>, %arg3: memref<1x64xf32, #tpu.memory_space<vmem>>, %arg4: memref<9x128x16xf32, #tpu.memory_space<vmem>>, %arg5: memref<2x128xf32, #tpu.memory_space<vmem>>, %arg6: memref<64x6xf32, #tpu.memory_space<vmem>>, %arg7: memref<6x64xf32, #tpu.memory_space<vmem>>, %arg8: memref<32x32xf32, #tpu.memory_space<vmem>>, %arg9: memref<32x32xbf16, #tpu.memory_space<vmem>>, %arg10: memref<16x32xbf16, #tpu.memory_space<vmem>>, %arg11: memref<1x32xf32, #tpu.memory_space<vmem>>, %arg12: memref<128x32xf32, #tpu.memory_space<vmem>>, %arg13: memref<160x16xf32, #tpu.memory_space<vmem>>) attributes {dimension_semantics = [#tpu.dimension_semantics<arbitrary>], iteration_bounds = array<i64: 1>, scalar_prefetch = 0 : i64, scratch_operands = 1 : i64, tpu.core_type = #tpu.core_type<tc>, window_params = [{pipeline_mode = #tpu.pipeline_mode<synchronous>, transform_indices = @transform_0, window_bounds = array<i64: 128, 32>}, {pipeline_mode = #tpu.pipeline_mode<synchronous>, transform_indices = @transform_1, window_bounds = array<i64: 32, 64>}, {pipeline_mode = #tpu.pipeline_mode<synchronous>, transform_indices = @transform_2, window_bounds = array<i64: 1, 64>}, {pipeline_mode = #tpu.pipeline_mode<synchronous>, transform_indices = @transform_3, window_bounds = array<i64: 9, 128, 16>}, {pipeline_mode = #tpu.pipeline_mode<synchronous>, transform_indices = @transform_4, window_bounds = array<i64: 2, 128>}, {pipeline_mode = #tpu.pipeline_mode<synchronous>, transform_indices = @transform_5, window_bounds = array<i64: 64, 6>}, {pipeline_mode = #tpu.pipeline_mode<synchronous>, transform_indices = @transform_6, window_bounds = array<i64: 6, 64>}, {pipeline_mode = #tpu.pipeline_mode<synchronous>, transform_indices = @transform_7, window_bounds = array<i64: 32, 32>}, {pipeline_mode = #tpu.pipeline_mode<synchronous>, transform_indices = @transform_8, window_bounds = array<i64: 32, 32>}, {pipeline_mode = #tpu.pipeline_mode<synchronous>, transform_indices = @transform_9, window_bounds = array<i64: 16, 32>}, {pipeline_mode = #tpu.pipeline_mode<synchronous>, transform_indices = @transform_10, window_bounds = array<i64: 1, 32>}, {pipeline_mode = #tpu.pipeline_mode<synchronous>, transform_indices = @transform_11, window_bounds = array<i64: 128, 32>}]} {
    %c0 = arith.constant 0 : index
    %c0_0 = arith.constant 0 : index
    %0 = vector.load %arg1[%c0, %c0_0] : memref<128x32xbf16, #tpu.memory_space<vmem>>, vector<128x32xbf16>
    %c0_1 = arith.constant 0 : index
    %c0_2 = arith.constant 0 : index
    %1 = vector.load %arg2[%c0_1, %c0_2] : memref<32x64xbf16, #tpu.memory_space<vmem>>, vector<32x64xbf16>
    %cst = arith.constant dense<0.000000e+00> : vector<128x64xf32>
    %2 = tpu.matmul %0, %1, %cst {dimension_numbers = #tpu.dot_dimension_numbers<[1], [0], [0], [1], [0, 0, 1, 1], [], []>} : vector<128x32xbf16>, vector<32x64xbf16>, vector<128x64xf32> -> vector<128x64xf32>
    %c0_3 = arith.constant 0 : index
    %c0_4 = arith.constant 0 : index
    %3 = vector.load %arg3[%c0_3, %c0_4] : memref<1x64xf32, #tpu.memory_space<vmem>>, vector<1x64xf32>
    %4 = vector.broadcast %3 : vector<1x64xf32> to vector<128x64xf32>
    %5 = arith.addf %2, %4 : vector<128x64xf32>
    %cst_5 = arith.constant 0.000000e+00 : f32
    %6 = vector.broadcast %cst_5 : f32 to vector<128x64xf32>
    %7 = arith.maximumf %5, %6 : vector<128x64xf32>
    %8 = arith.mulf %7, %7 : vector<128x64xf32>
    %9 = arith.mulf %8, %7 : vector<128x64xf32>
    %10 = arith.mulf %9, %9 : vector<128x64xf32>
    %11 = vector.extract_strided_slice %9 {offsets = [0, 0], sizes = [128, 32], strides = [1, 1]} : vector<128x64xf32> to vector<128x32xf32>
    %12 = vector.extract_strided_slice %9 {offsets = [0, 32], sizes = [128, 16], strides = [1, 1]} : vector<128x64xf32> to vector<128x16xf32>
    %13 = vector.extract_strided_slice %5 {offsets = [0, 48], sizes = [128, 16], strides = [1, 1]} : vector<128x64xf32> to vector<128x16xf32>
    %c0_6 = arith.constant 0 : index
    %c0_7 = arith.constant 0 : index
    %14 = vector.load %arg5[%c0_6, %c0_7] : memref<2x128xf32, #tpu.memory_space<vmem>>, vector<2x128xf32>
    %cst_8 = arith.constant dense<0.000000e+00> : vector<2x64xf32>
    %15 = tpu.matmul %14, %8, %cst_8 {dimension_numbers = #tpu.dot_dimension_numbers<[1], [0], [0], [1], [0, 0, 1, 1], [], []>} : vector<2x128xf32>, vector<128x64xf32>, vector<2x64xf32> -> vector<2x64xf32>
    %c0_9 = arith.constant 0 : index
    %c0_10 = arith.constant 0 : index
    %16 = vector.load %arg5[%c0_9, %c0_10] : memref<2x128xf32, #tpu.memory_space<vmem>>, vector<2x128xf32>
    %cst_11 = arith.constant dense<0.000000e+00> : vector<2x64xf32>
    %17 = tpu.matmul %16, %10, %cst_11 {dimension_numbers = #tpu.dot_dimension_numbers<[1], [0], [0], [1], [0, 0, 1, 1], [], []>} : vector<2x128xf32>, vector<128x64xf32>, vector<2x64xf32> -> vector<2x64xf32>
    %c0_12 = arith.constant 0 : index
    %c0_13 = arith.constant 0 : index
    %18 = vector.load %arg6[%c0_12, %c0_13] : memref<64x6xf32, #tpu.memory_space<vmem>>, vector<64x6xf32>
    %cst_14 = arith.constant dense<0.000000e+00> : vector<2x6xf32>
    %19 = tpu.matmul %15, %18, %cst_14 {dimension_numbers = #tpu.dot_dimension_numbers<[1], [0], [0], [1], [0, 0, 1, 1], [], []>} : vector<2x64xf32>, vector<64x6xf32>, vector<2x6xf32> -> vector<2x6xf32>
    %c0_15 = arith.constant 0 : index
    %c0_16 = arith.constant 0 : index
    %20 = vector.load %arg6[%c0_15, %c0_16] : memref<64x6xf32, #tpu.memory_space<vmem>>, vector<64x6xf32>
    %cst_17 = arith.constant dense<0.000000e+00> : vector<2x6xf32>
    %21 = tpu.matmul %17, %20, %cst_17 {dimension_numbers = #tpu.dot_dimension_numbers<[1], [0], [0], [1], [0, 0, 1, 1], [], []>} : vector<2x64xf32>, vector<64x6xf32>, vector<2x6xf32> -> vector<2x6xf32>
    %22 = math.sqrt %19 : vector<2x6xf32>
    %23 = math.rsqrt %21 : vector<2x6xf32>
    %24 = arith.mulf %22, %23 : vector<2x6xf32>
    %c0_18 = arith.constant 0 : index
    %c0_19 = arith.constant 0 : index
    %25 = vector.load %arg7[%c0_18, %c0_19] : memref<6x64xf32, #tpu.memory_space<vmem>>, vector<6x64xf32>
    %cst_20 = arith.constant dense<0.000000e+00> : vector<2x64xf32>
    %26 = tpu.matmul %24, %25, %cst_20 {dimension_numbers = #tpu.dot_dimension_numbers<[1], [0], [0], [1], [0, 0, 1, 1], [], []>} : vector<2x6xf32>, vector<6x64xf32>, vector<2x64xf32> -> vector<2x64xf32>
    %27 = vector.extract_strided_slice %26 {offsets = [0, 0], sizes = [2, 32], strides = [1, 1]} : vector<2x64xf32> to vector<2x32xf32>
    %28 = vector.extract_strided_slice %26 {offsets = [0, 32], sizes = [2, 32], strides = [1, 1]} : vector<2x64xf32> to vector<2x32xf32>
    %29 = arith.mulf %27, %28 : vector<2x32xf32>
    %cst_21 = arith.constant 0.000000e+00 : f32
    %30 = vector.broadcast %cst_21 : f32 to vector<160x16xf32>
    %c0_22 = arith.constant 0 : index
    %c0_23 = arith.constant 0 : index
    %31 = vector.load %arg13[%c0_22, %c0_23] : memref<160x16xf32, #tpu.memory_space<vmem>>, vector<160x16xf32>
    tpu.vector_store %arg13[%c0_22, %c0_23], %30 {strides = array<i32>} : memref<160x16xf32, #tpu.memory_space<vmem>>, vector<160x16xf32>,
    %c16 = arith.constant 16 : index
    %c0_24 = arith.constant 0 : index
    %32 = vector.load %arg13[%c16, %c0_24] : memref<160x16xf32, #tpu.memory_space<vmem>>, vector<128x16xf32>
    tpu.vector_store %arg13[%c16, %c0_24], %13 {strides = array<i32>} : memref<160x16xf32, #tpu.memory_space<vmem>>, vector<128x16xf32>,
    %c4 = arith.constant 4 : index
    %c0_25 = arith.constant 0 : index
    %c0_26 = arith.constant 0 : index
    %33 = vector.load %arg4[%c4, %c0_25, %c0_26] : memref<9x128x16xf32, #tpu.memory_space<vmem>>, vector<1x128x16xf32>
    %34 = vector.shape_cast %33 : vector<1x128x16xf32> to vector<128x16xf32>
    %35 = arith.mulf %13, %34 : vector<128x16xf32>
    %c7 = arith.constant 7 : index
    %c0_27 = arith.constant 0 : index
    %36 = vector.load %arg13[%c7, %c0_27] : memref<160x16xf32, #tpu.memory_space<vmem>>, vector<128x16xf32>
    %c0_28 = arith.constant 0 : index
    %c0_29 = arith.constant 0 : index
    %c0_30 = arith.constant 0 : index
    %37 = vector.load %arg4[%c0_28, %c0_29, %c0_30] : memref<9x128x16xf32, #tpu.memory_space<vmem>>, vector<1x128x16xf32>
    %38 = vector.shape_cast %37 : vector<1x128x16xf32> to vector<128x16xf32>
    %39 = arith.mulf %36, %38 : vector<128x16xf32>
    %40 = arith.addf %35, %39 : vector<128x16xf32>
    %c8 = arith.constant 8 : index
    %c0_31 = arith.constant 0 : index
    %41 = vector.load %arg13[%c8, %c0_31] : memref<160x16xf32, #tpu.memory_space<vmem>>, vector<128x16xf32>
    %c1 = arith.constant 1 : index
    %c0_32 = arith.constant 0 : index
    %c0_33 = arith.constant 0 : index
    %42 = vector.load %arg4[%c1, %c0_32, %c0_33] : memref<9x128x16xf32, #tpu.memory_space<vmem>>, vector<1x128x16xf32>
    %43 = vector.shape_cast %42 : vector<1x128x16xf32> to vector<128x16xf32>
    %44 = arith.mulf %41, %43 : vector<128x16xf32>
    %45 = arith.addf %40, %44 : vector<128x16xf32>
    %c9 = arith.constant 9 : index
    %c0_34 = arith.constant 0 : index
    %46 = vector.load %arg13[%c9, %c0_34] : memref<160x16xf32, #tpu.memory_space<vmem>>, vector<128x16xf32>
    %c2 = arith.constant 2 : index
    %c0_35 = arith.constant 0 : index
    %c0_36 = arith.constant 0 : index
    %47 = vector.load %arg4[%c2, %c0_35, %c0_36] : memref<9x128x16xf32, #tpu.memory_space<vmem>>, vector<1x128x16xf32>
    %48 = vector.shape_cast %47 : vector<1x128x16xf32> to vector<128x16xf32>
    %49 = arith.mulf %46, %48 : vector<128x16xf32>
    %50 = arith.addf %45, %49 : vector<128x16xf32>
    %c15 = arith.constant 15 : index
    %c0_37 = arith.constant 0 : index
    %51 = vector.load %arg13[%c15, %c0_37] : memref<160x16xf32, #tpu.memory_space<vmem>>, vector<128x16xf32>
    %c3 = arith.constant 3 : index
    %c0_38 = arith.constant 0 : index
    %c0_39 = arith.constant 0 : index
    %52 = vector.load %arg4[%c3, %c0_38, %c0_39] : memref<9x128x16xf32, #tpu.memory_space<vmem>>, vector<1x128x16xf32>
    %53 = vector.shape_cast %52 : vector<1x128x16xf32> to vector<128x16xf32>
    %54 = arith.mulf %51, %53 : vector<128x16xf32>
    %55 = arith.addf %50, %54 : vector<128x16xf32>
    %c17 = arith.constant 17 : index
    %c0_40 = arith.constant 0 : index
    %56 = vector.load %arg13[%c17, %c0_40] : memref<160x16xf32, #tpu.memory_space<vmem>>, vector<128x16xf32>
    %c5 = arith.constant 5 : index
    %c0_41 = arith.constant 0 : index
    %c0_42 = arith.constant 0 : index
    %57 = vector.load %arg4[%c5, %c0_41, %c0_42] : memref<9x128x16xf32, #tpu.memory_space<vmem>>, vector<1x128x16xf32>
    %58 = vector.shape_cast %57 : vector<1x128x16xf32> to vector<128x16xf32>
    %59 = arith.mulf %56, %58 : vector<128x16xf32>
    %60 = arith.addf %55, %59 : vector<128x16xf32>
    %c23 = arith.constant 23 : index
    %c0_43 = arith.constant 0 : index
    %61 = vector.load %arg13[%c23, %c0_43] : memref<160x16xf32, #tpu.memory_space<vmem>>, vector<128x16xf32>
    %c6 = arith.constant 6 : index
    %c0_44 = arith.constant 0 : index
    %c0_45 = arith.constant 0 : index
    %62 = vector.load %arg4[%c6, %c0_44, %c0_45] : memref<9x128x16xf32, #tpu.memory_space<vmem>>, vector<1x128x16xf32>
    %63 = vector.shape_cast %62 : vector<1x128x16xf32> to vector<128x16xf32>
    %64 = arith.mulf %61, %63 : vector<128x16xf32>
    %65 = arith.addf %60, %64 : vector<128x16xf32>
    %c24 = arith.constant 24 : index
    %c0_46 = arith.constant 0 : index
    %66 = vector.load %arg13[%c24, %c0_46] : memref<160x16xf32, #tpu.memory_space<vmem>>, vector<128x16xf32>
    %c7_47 = arith.constant 7 : index
    %c0_48 = arith.constant 0 : index
    %c0_49 = arith.constant 0 : index
    %67 = vector.load %arg4[%c7_47, %c0_48, %c0_49] : memref<9x128x16xf32, #tpu.memory_space<vmem>>, vector<1x128x16xf32>
    %68 = vector.shape_cast %67 : vector<1x128x16xf32> to vector<128x16xf32>
    %69 = arith.mulf %66, %68 : vector<128x16xf32>
    %70 = arith.addf %65, %69 : vector<128x16xf32>
    %c25 = arith.constant 25 : index
    %c0_50 = arith.constant 0 : index
    %71 = vector.load %arg13[%c25, %c0_50] : memref<160x16xf32, #tpu.memory_space<vmem>>, vector<128x16xf32>
    %c8_51 = arith.constant 8 : index
    %c0_52 = arith.constant 0 : index
    %c0_53 = arith.constant 0 : index
    %72 = vector.load %arg4[%c8_51, %c0_52, %c0_53] : memref<9x128x16xf32, #tpu.memory_space<vmem>>, vector<1x128x16xf32>
    %73 = vector.shape_cast %72 : vector<1x128x16xf32> to vector<128x16xf32>
    %74 = arith.mulf %71, %73 : vector<128x16xf32>
    %75 = arith.addf %70, %74 : vector<128x16xf32>
    %76 = arith.truncf %11 : vector<128x32xf32> to vector<128x32xbf16>
    %c0_54 = arith.constant 0 : index
    %c0_55 = arith.constant 0 : index
    %77 = vector.load %arg8[%c0_54, %c0_55] : memref<32x32xf32, #tpu.memory_space<vmem>>, vector<32x32xf32>
    %78 = vector.extract_strided_slice %12 {offsets = [0, 0], sizes = [64, 16], strides = [1, 1]} : vector<128x16xf32> to vector<64x16xf32>
    %79 = vector.extract_strided_slice %13 {offsets = [0, 0], sizes = [64, 16], strides = [1, 1]} : vector<128x16xf32> to vector<64x16xf32>
    %cst_56 = arith.constant dense<0.000000e+00> : vector<16x16xf32>
    %80 = tpu.matmul %78, %79, %cst_56 {dimension_numbers = #tpu.dot_dimension_numbers<[0], [0], [1], [1], [0, 1, 1, 1], [], []>} : vector<64x16xf32>, vector<64x16xf32>, vector<16x16xf32> -> vector<16x16xf32>
    %81 = tpu.concatenate %80, %80 in 1 : vector<16x16xf32>, vector<16x16xf32> -> vector<16x32xf32>
    %82 = tpu.concatenate %81, %81 in 0 : vector<16x32xf32>, vector<16x32xf32> -> vector<32x32xf32>
    %83 = vector.extract_strided_slice %29 {offsets = [0, 0], sizes = [1, 32], strides = [1, 1]} : vector<2x32xf32> to vector<1x32xf32>
    %84 = vector.broadcast %83 : vector<1x32xf32> to vector<32x32xf32>
    %85 = arith.mulf %77, %84 : vector<32x32xf32>
    %86 = arith.mulf %82, %85 : vector<32x32xf32>
    %87 = vector.extract_strided_slice %76 {offsets = [0, 0], sizes = [64, 32], strides = [1, 1]} : vector<128x32xbf16> to vector<64x32xbf16>
    %88 = arith.truncf %86 : vector<32x32xf32> to vector<32x32xbf16>
    %cst_57 = arith.constant dense<0.000000e+00> : vector<64x32xf32>
    %89 = tpu.matmul %87, %88, %cst_57 {dimension_numbers = #tpu.dot_dimension_numbers<[1], [0], [0], [1], [0, 0, 1, 1], [], []>} : vector<64x32xbf16>, vector<32x32xbf16>, vector<64x32xf32> -> vector<64x32xf32>
    %90 = vector.extract_strided_slice %12 {offsets = [64, 0], sizes = [64, 16], strides = [1, 1]} : vector<128x16xf32> to vector<64x16xf32>
    %91 = vector.extract_strided_slice %13 {offsets = [64, 0], sizes = [64, 16], strides = [1, 1]} : vector<128x16xf32> to vector<64x16xf32>
    %cst_58 = arith.constant dense<0.000000e+00> : vector<16x16xf32>
    %92 = tpu.matmul %90, %91, %cst_58 {dimension_numbers = #tpu.dot_dimension_numbers<[0], [0], [1], [1], [0, 1, 1, 1], [], []>} : vector<64x16xf32>, vector<64x16xf32>, vector<16x16xf32> -> vector<16x16xf32>
    %93 = tpu.concatenate %92, %92 in 1 : vector<16x16xf32>, vector<16x16xf32> -> vector<16x32xf32>
    %94 = tpu.concatenate %93, %93 in 0 : vector<16x32xf32>, vector<16x32xf32> -> vector<32x32xf32>
    %95 = vector.extract_strided_slice %29 {offsets = [1, 0], sizes = [1, 32], strides = [1, 1]} : vector<2x32xf32> to vector<1x32xf32>
    %96 = vector.broadcast %95 : vector<1x32xf32> to vector<32x32xf32>
    %97 = arith.mulf %77, %96 : vector<32x32xf32>
    %98 = arith.mulf %94, %97 : vector<32x32xf32>
    %99 = vector.extract_strided_slice %76 {offsets = [64, 0], sizes = [64, 32], strides = [1, 1]} : vector<128x32xbf16> to vector<64x32xbf16>
    %100 = arith.truncf %98 : vector<32x32xf32> to vector<32x32xbf16>
    %cst_59 = arith.constant dense<0.000000e+00> : vector<64x32xf32>
    %101 = tpu.matmul %99, %100, %cst_59 {dimension_numbers = #tpu.dot_dimension_numbers<[1], [0], [0], [1], [0, 0, 1, 1], [], []>} : vector<64x32xbf16>, vector<32x32xbf16>, vector<64x32xf32> -> vector<64x32xf32>
    %102 = tpu.concatenate %89, %101 in 0 : vector<64x32xf32>, vector<64x32xf32> -> vector<128x32xf32>
    %103 = arith.truncf %102 : vector<128x32xf32> to vector<128x32xbf16>
    %c0_60 = arith.constant 0 : index
    %c0_61 = arith.constant 0 : index
    %104 = vector.load %arg9[%c0_60, %c0_61] : memref<32x32xbf16, #tpu.memory_space<vmem>>, vector<32x32xbf16>
    %cst_62 = arith.constant dense<0.000000e+00> : vector<128x32xf32>
    %105 = tpu.matmul %103, %104, %cst_62 {dimension_numbers = #tpu.dot_dimension_numbers<[1], [0], [0], [1], [0, 0, 1, 1], [], []>} : vector<128x32xbf16>, vector<32x32xbf16>, vector<128x32xf32> -> vector<128x32xf32>
    %106 = arith.truncf %75 : vector<128x16xf32> to vector<128x16xbf16>
    %c0_63 = arith.constant 0 : index
    %c0_64 = arith.constant 0 : index
    %107 = vector.load %arg10[%c0_63, %c0_64] : memref<16x32xbf16, #tpu.memory_space<vmem>>, vector<16x32xbf16>
    %cst_65 = arith.constant dense<0.000000e+00> : vector<128x32xf32>
    %108 = tpu.matmul %106, %107, %cst_65 {dimension_numbers = #tpu.dot_dimension_numbers<[1], [0], [0], [1], [0, 0, 1, 1], [], []>} : vector<128x16xbf16>, vector<16x32xbf16>, vector<128x32xf32> -> vector<128x32xf32>
    %109 = arith.addf %105, %108 : vector<128x32xf32>
    %c0_66 = arith.constant 0 : index
    %c0_67 = arith.constant 0 : index
    %110 = vector.load %arg11[%c0_66, %c0_67] : memref<1x32xf32, #tpu.memory_space<vmem>>, vector<1x32xf32>
    %111 = vector.broadcast %110 : vector<1x32xf32> to vector<128x32xf32>
    %112 = arith.addf %109, %111 : vector<128x32xf32>
    %c0_68 = arith.constant 0 : index
    %c0_69 = arith.constant 0 : index
    %113 = vector.load %arg12[%c0_68, %c0_69] : memref<128x32xf32, #tpu.memory_space<vmem>>, vector<128x32xf32>
    tpu.vector_store %arg12[%c0_68, %c0_69], %112 {strides = array<i32>} : memref<128x32xf32, #tpu.memory_space<vmem>>, vector<128x32xf32>,
    return
  }
  func.func @transform_0(%arg0: i32) -> (i32, i32) {
    %c0_i32 = arith.constant 0 : i32
    %c0_i32_0 = arith.constant 0 : i32
    %c0_i32_1 = arith.constant 0 : i32
    return %c0_i32, %c0_i32_0 : i32, i32
  }
  func.func @transform_1(%arg0: i32) -> (i32, i32) {
    %c0_i32 = arith.constant 0 : i32
    %c0_i32_0 = arith.constant 0 : i32
    %c0_i32_1 = arith.constant 0 : i32
    return %c0_i32, %c0_i32_0 : i32, i32
  }
  func.func @transform_2(%arg0: i32) -> (i32, i32) {
    %c0_i32 = arith.constant 0 : i32
    %c0_i32_0 = arith.constant 0 : i32
    %c0_i32_1 = arith.constant 0 : i32
    return %c0_i32, %c0_i32_0 : i32, i32
  }
  func.func @transform_3(%arg0: i32) -> (i32, i32, i32) {
    %c0_i32 = arith.constant 0 : i32
    %c0_i32_0 = arith.constant 0 : i32
    %c0_i32_1 = arith.constant 0 : i32
    %c0_i32_2 = arith.constant 0 : i32
    return %c0_i32, %c0_i32_0, %c0_i32_1 : i32, i32, i32
  }
  func.func @transform_4(%arg0: i32) -> (i32, i32) {
    %c0_i32 = arith.constant 0 : i32
    %c0_i32_0 = arith.constant 0 : i32
    %c0_i32_1 = arith.constant 0 : i32
    return %c0_i32, %c0_i32_0 : i32, i32
  }
  func.func @transform_5(%arg0: i32) -> (i32, i32) {
    %c0_i32 = arith.constant 0 : i32
    %c0_i32_0 = arith.constant 0 : i32
    %c0_i32_1 = arith.constant 0 : i32
    return %c0_i32, %c0_i32_0 : i32, i32
  }
  func.func @transform_6(%arg0: i32) -> (i32, i32) {
    %c0_i32 = arith.constant 0 : i32
    %c0_i32_0 = arith.constant 0 : i32
    %c0_i32_1 = arith.constant 0 : i32
    return %c0_i32, %c0_i32_0 : i32, i32
  }
  func.func @transform_7(%arg0: i32) -> (i32, i32) {
    %c0_i32 = arith.constant 0 : i32
    %c0_i32_0 = arith.constant 0 : i32
    %c0_i32_1 = arith.constant 0 : i32
    return %c0_i32, %c0_i32_0 : i32, i32
  }
  func.func @transform_8(%arg0: i32) -> (i32, i32) {
    %c0_i32 = arith.constant 0 : i32
    %c0_i32_0 = arith.constant 0 : i32
    %c0_i32_1 = arith.constant 0 : i32
    return %c0_i32, %c0_i32_0 : i32, i32
  }
  func.func @transform_9(%arg0: i32) -> (i32, i32) {
    %c0_i32 = arith.constant 0 : i32
    %c0_i32_0 = arith.constant 0 : i32
    %c0_i32_1 = arith.constant 0 : i32
    return %c0_i32, %c0_i32_0 : i32, i32
  }
  func.func @transform_10(%arg0: i32) -> (i32, i32) {
    %c0_i32 = arith.constant 0 : i32
    %c0_i32_0 = arith.constant 0 : i32
    %c0_i32_1 = arith.constant 0 : i32
    return %c0_i32, %c0_i32_0 : i32, i32
  }
  func.func @transform_11(%arg0: i32) -> (i32, i32) {
    %c0_i32 = arith.constant 0 : i32
    %c0_i32_0 = arith.constant 0 : i32
    %c0_i32_1 = arith.constant 0 : i32
    return %c0_i32, %c0_i32_0 : i32, i32
  }
}

</mosaic_0001>

<llo_original>
// kernel: tpu_custom_call.1
$region0: #{tpu_custom_call.1}
  #allocation0 [shape = 'u32[]', space=smem, size = 0x4, offset = 0x4, fixed_abs, tag = 'smem constant byte address 0x4 - core index']
  #allocation1 [shape = 'u32[144,128]{1,0:T(1,128)}', space=vmem, size = 0x12000, scoped, tag = 'internal scratch']
  #allocation2 [shape = 'f32[160,16]{1,0:T(8,128)}', space=vmem, size = 0x14000, scoped, tag = 'scratch operand']
  %s0 = inlined_call_operand.vmem [shape: bf16[128,32], index: 0, kind: input, shape index: {}]
  %s1 = inlined_call_operand.vmem [shape: bf16[32,64], index: 1, kind: input, shape index: {}]
  %s2 = inlined_call_operand.vmem [shape: f32[1,64], index: 2, kind: input, shape index: {}]
  %s3 = inlined_call_operand.vmem [shape: f32[9,128,16], index: 3, kind: input, shape index: {}]
  %s4 = inlined_call_operand.vmem [shape: f32[2,128], index: 4, kind: input, shape index: {}]
  %s5 = inlined_call_operand.vmem [shape: f32[64,6], index: 5, kind: input, shape index: {}]
  %s6 = inlined_call_operand.vmem [shape: f32[6,64], index: 6, kind: input, shape index: {}]
  %s7 = inlined_call_operand.vmem [shape: f32[32,32], index: 7, kind: input, shape index: {}]
  %s8 = inlined_call_operand.vmem [shape: bf16[32,32], index: 8, kind: input, shape index: {}]
  %s9 = inlined_call_operand.vmem [shape: bf16[16,32], index: 9, kind: input, shape index: {}]
  %s10 = inlined_call_operand.vmem [shape: f32[1,32], index: 10, kind: input, shape index: {}]
  %s11 = inlined_call_operand.vmem [shape: f32[128,32], index: 11, kind: output, shape index: {}]
  %s12 = sld [smem:[#allocation0]]
  $region54: #{tpu_custom_call.1} parent=0
    _
  %s14 = ssub.s32 1, %s12
  %s15 = scalar_select 0, %s14, %s12
  // Predicated region
  $region2: #{tpu_custom_call.1} parent=0 // pred_check
    _
  $region3: #{tpu_custom_call.1} parent=0 // pred_check_branch
    %17 = sbr.rel (0) target = $region5
  $region4: #{tpu_custom_call.1} parent=0 // pred_region
    _
  $region5: #{tpu_custom_call.1} parent=0 // pred_fallthru
    _
  // Predicated region
  $region6: #{tpu_custom_call.1} parent=0 // pred_check
    _
  $region7: #{tpu_custom_call.1} parent=0 // pred_check_branch
    %19 = sbr.rel (0) target = $region9
  $region8: #{tpu_custom_call.1} parent=0 // pred_region
    _
  $region9: #{tpu_custom_call.1} parent=0 // pred_fallthru
    _
  // Predicated region
  $region10: #{tpu_custom_call.1} parent=0 // pred_check
    _
  $region11: #{tpu_custom_call.1} parent=0 // pred_check_branch
    %21 = sbr.rel (0) target = $region13
  $region12: #{tpu_custom_call.1} parent=0 // pred_region
    _
  $region13: #{tpu_custom_call.1} parent=0 // pred_fallthru
    _
  // Predicated region
  $region14: #{tpu_custom_call.1} parent=0 // pred_check
    _
  $region15: #{tpu_custom_call.1} parent=0 // pred_check_branch
    %23 = sbr.rel (0) target = $region17
  $region16: #{tpu_custom_call.1} parent=0 // pred_region
    _
  $region17: #{tpu_custom_call.1} parent=0 // pred_fallthru
    _
  // Predicated region
  $region18: #{tpu_custom_call.1} parent=0 // pred_check
    _
  $region19: #{tpu_custom_call.1} parent=0 // pred_check_branch
    %25 = sbr.rel (0) target = $region21
  $region20: #{tpu_custom_call.1} parent=0 // pred_region
    _
  $region21: #{tpu_custom_call.1} parent=0 // pred_fallthru
    _
  // Predicated region
  $region22: #{tpu_custom_call.1} parent=0 // pred_check
    _
  $region23: #{tpu_custom_call.1} parent=0 // pred_check_branch
    %27 = sbr.rel (0) target = $region25
  $region24: #{tpu_custom_call.1} parent=0 // pred_region
    _
  $region25: #{tpu_custom_call.1} parent=0 // pred_fallthru
    _
  // Predicated region
  $region26: #{tpu_custom_call.1} parent=0 // pred_check
    _
  $region27: #{tpu_custom_call.1} parent=0 // pred_check_branch
    %29 = sbr.rel (0) target = $region29
  $region28: #{tpu_custom_call.1} parent=0 // pred_region
    _
  $region29: #{tpu_custom_call.1} parent=0 // pred_fallthru
    _
  // Predicated region
  $region30: #{tpu_custom_call.1} parent=0 // pred_check
    _
  $region31: #{tpu_custom_call.1} parent=0 // pred_check_branch
    %31 = sbr.rel (0) target = $region33
  $region32: #{tpu_custom_call.1} parent=0 // pred_region
    _
  $region33: #{tpu_custom_call.1} parent=0 // pred_fallthru
    _
  // Predicated region
  $region34: #{tpu_custom_call.1} parent=0 // pred_check
    _
  $region35: #{tpu_custom_call.1} parent=0 // pred_check_branch
    %33 = sbr.rel (0) target = $region37
  $region36: #{tpu_custom_call.1} parent=0 // pred_region
    _
  $region37: #{tpu_custom_call.1} parent=0 // pred_fallthru
    _
  // Predicated region
  $region38: #{tpu_custom_call.1} parent=0 // pred_check
    _
  $region39: #{tpu_custom_call.1} parent=0 // pred_check_branch
    %35 = sbr.rel (0) target = $region41
  $region40: #{tpu_custom_call.1} parent=0 // pred_region
    _
  $region41: #{tpu_custom_call.1} parent=0 // pred_fallthru
    _
  // Predicated region
  $region42: #{tpu_custom_call.1} parent=0 // pred_check
    _
  $region43: #{tpu_custom_call.1} parent=0 // pred_check_branch
    %37 = sbr.rel (0) target = $region45
  $region44: #{tpu_custom_call.1} parent=0 // pred_region
    _
  $region45: #{tpu_custom_call.1} parent=0 // pred_fallthru
    _
  %v39 = vld [vmem:[%s0] sm:$0xf]
  %v40 = vld [vmem:[%s0 + $0x4] sm:$0xf]
  %v41 = vld [vmem:[%s0 + $0x8] sm:$0xf]
  %v42 = vld [vmem:[%s0 + $0xc] sm:$0xf]
  %v43 = vld [vmem:[%s0 + $0x10] sm:$0xf]
  %v44 = vld [vmem:[%s0 + $0x14] sm:$0xf]
  %v45 = vld [vmem:[%s0 + $0x18] sm:$0xf]
  %v46 = vld [vmem:[%s0 + $0x1c] sm:$0xf]
  %v47 = vld [vmem:[%s0 + $0x20] sm:$0xf]
  %v48 = vld [vmem:[%s0 + $0x24] sm:$0xf]
  %v49 = vld [vmem:[%s0 + $0x28] sm:$0xf]
  %v50 = vld [vmem:[%s0 + $0x2c] sm:$0xf]
  %v51 = vld [vmem:[%s0 + $0x30] sm:$0xf]
  %v52 = vld [vmem:[%s0 + $0x34] sm:$0xf]
  %v53 = vld [vmem:[%s0 + $0x38] sm:$0xf]
  %v54 = vld [vmem:[%s0 + $0x3c] sm:$0xf]
  %v55 = vld [vmem:[%s1] sm:$0xf]
  %v56 = vld [vmem:[%s1 + $0x4] sm:$0xf]
  %v57 = vld [vmem:[%s1 + $0x8] sm:$0xf]
  %v58 = vld [vmem:[%s1 + $0xc] sm:$0xf]
  %v59 = vld [vmem:[%s2] sm:$0x1]
  %v61 = vlaneseq
  %v62 = vshrl.u32 %v61, 7
  %v63 = vsub.s32 0, %v62
  %v64 = vrot.slane %v59, %v63
  %v82 = vunpack.c.l.b16 %v39
  %v83 = vunpack.c.l.b16 %v40
  %v84 = vunpack.c.l.b16 %v41
  %v85 = vunpack.c.l.b16 %v42
  %v86 = vunpack.c.l.b16 %v43
  %v87 = vunpack.c.l.b16 %v44
  %v88 = vunpack.c.l.b16 %v45
  %v89 = vunpack.c.l.b16 %v46
  %v90 = vunpack.c.l.b16 %v47
  %v91 = vunpack.c.l.b16 %v48
  %v92 = vunpack.c.l.b16 %v49
  %v93 = vunpack.c.l.b16 %v50
  %v94 = vunpack.c.l.b16 %v51
  %v95 = vunpack.c.l.b16 %v52
  %v96 = vunpack.c.l.b16 %v53
  %v97 = vunpack.c.l.b16 %v54
  %v98 = vpack.c.b16 %v83, %v82
  %v99 = vpack.c.b16 %v85, %v84
  %v100 = vpack.c.b16 %v87, %v86
  %v101 = vpack.c.b16 %v89, %v88
  %v102 = vpack.c.b16 %v91, %v90
  %v103 = vpack.c.b16 %v93, %v92
  %v104 = vpack.c.b16 %v95, %v94
  %v105 = vpack.c.b16 %v97, %v96
  %v110 = vunpack.c.l.b16 %v55
  %v111 = vunpack.c.l.b16 %v56
  %v112 = vunpack.c.l.b16 %v57
  %v113 = vunpack.c.l.b16 %v58
  %v114 = vpack.c.b16 %v111, %v110
  %v115 = vpack.c.b16 %v113, %v112
  %vm118 = vcmask 261120
  %v120 = vsel %vm118, %v98, 0
  %v123 = vsel %vm118, %v99, 0
  %v126 = vsel %vm118, %v100, 0
  %v129 = vsel %vm118, %v101, 0
  %v132 = vsel %vm118, %v102, 0
  %v135 = vsel %vm118, %v103, 0
  %v138 = vsel %vm118, %v104, 0
  %v141 = vsel %vm118, %v105, 0
  %143 = vmatprep.subr.bf16.mxu0 0
  %144 = vmatpush1.bf16.msra.mxu0 %v114
  %145 = vmatprep.subr.bf16.mxu0 0
  %146 = vmatpush1.bf16.msra.mxu0 %v115
  %147 = vmatprep.subr.bf16.mxu0 0
  %148 = vmatpush1.bf16.msra.mxu0 0
  %149 = vmatprep.subr.bf16.mxu0 0
  %150 = vmatpush1.bf16.msra.mxu0 0
  %151 = vmatprep.subr.bf16.mxu0 0
  %152 = vmatpush1.bf16.msra.mxu0 0
  %153 = vmatprep.subr.bf16.mxu0 0
  %154 = vmatpush1.bf16.msra.mxu0 0
  %155 = vmatprep.subr.bf16.mxu0 0
  %156 = vmatpush1.bf16.msra.mxu0 0
  %157 = vmatprep.subr.bf16.mxu0 0
  %158 = vmatpush1.bf16.msra.mxu0 0
  %159 = vmatprep.subr.bf16.mxu0 0
  %160 = vmatpush1.bf16.msra.mxu0 0
  %161 = vmatprep.subr.bf16.mxu0 0
  %162 = vmatpush1.bf16.msra.mxu0 0
  %163 = vmatprep.subr.bf16.mxu0 0
  %164 = vmatpush1.bf16.msra.mxu0 0
  %165 = vmatprep.subr.bf16.mxu0 0
  %166 = vmatpush1.bf16.msra.mxu0 0
  %167 = vmatprep.subr.bf16.mxu0 0
  %168 = vmatpush1.bf16.msra.mxu0 0
  %169 = vmatprep.subr.bf16.mxu0 0
  %170 = vmatpush1.bf16.msra.mxu0 0
  %171 = vmatprep.subr.bf16.mxu0 0
  %172 = vmatpush1.bf16.msra.mxu0 0
  %173 = vmatprep.subr.bf16.mxu0 0
  %174 = vmatpush1.bf16.msra.mxu0 0
  %175 = vmatprep.mubr.bf16.mxu0 0
  %176 = vmatmul.mubr.bf16.gmra.mrb[0].mxu0 %v120
  %v177 = vpop.f32.mrb[0].mxu0
  %v178 = vadd.f32 %v64, %v177
  %v179 = vpop.f32.mrb[0].mxu0
  %v180 = vpop.f32.mrb[0].mxu0
  %v181 = vadd.f32 %v64, %v180
  %v182 = vpop.f32.mrb[0].mxu0
  %183 = vmatprep.mubr.bf16.mxu0 0
  %184 = vmatmul.mubr.bf16.gmra.mrb[0].mxu0 %v123
  %v185 = vpop.f32.mrb[0].mxu0
  %v186 = vadd.f32 %v64, %v185
  %v187 = vpop.f32.mrb[0].mxu0
  %v188 = vpop.f32.mrb[0].mxu0
  %v189 = vadd.f32 %v64, %v188
  %v190 = vpop.f32.mrb[0].mxu0
  %191 = vmatprep.mubr.bf16.mxu0 0
  %192 = vmatmul.mubr.bf16.gmra.mrb[0].mxu0 %v126
  %v193 = vpop.f32.mrb[0].mxu0
  %v194 = vadd.f32 %v64, %v193
  %v195 = vpop.f32.mrb[0].mxu0
  %v196 = vpop.f32.mrb[0].mxu0
  %v197 = vadd.f32 %v64, %v196
  %v198 = vpop.f32.mrb[0].mxu0
  %199 = vmatprep.mubr.bf16.mxu0 0
  %200 = vmatmul.mubr.bf16.gmra.mrb[0].mxu0 %v129
  %v201 = vpop.f32.mrb[0].mxu0
  %v202 = vadd.f32 %v64, %v201
  %v203 = vpop.f32.mrb[0].mxu0
  %v204 = vpop.f32.mrb[0].mxu0
  %v205 = vadd.f32 %v64, %v204
  %v206 = vpop.f32.mrb[0].mxu0
  %207 = vmatprep.mubr.bf16.mxu0 0
  %208 = vmatmul.mubr.bf16.gmra.mrb[0].mxu0 %v132
  %v209 = vpop.f32.mrb[0].mxu0
  %v210 = vadd.f32 %v64, %v209
  %v211 = vpop.f32.mrb[0].mxu0
  %v212 = vpop.f32.mrb[0].mxu0
  %v213 = vadd.f32 %v64, %v212
  %v214 = vpop.f32.mrb[0].mxu0
  %215 = vmatprep.mubr.bf16.mxu0 0
  %216 = vmatmul.mubr.bf16.gmra.mrb[0].mxu0 %v135
  %v217 = vpop.f32.mrb[0].mxu0
  %v218 = vadd.f32 %v64, %v217
  %v219 = vpop.f32.mrb[0].mxu0
  %v220 = vpop.f32.mrb[0].mxu0
  %v221 = vadd.f32 %v64, %v220
  %v222 = vpop.f32.mrb[0].mxu0
  %223 = vmatprep.mubr.bf16.mxu0 0
  %224 = vmatmul.mubr.bf16.gmra.mrb[0].mxu0 %v138
  %v225 = vpop.f32.mrb[0].mxu0
  %v226 = vadd.f32 %v64, %v225
  %v227 = vpop.f32.mrb[0].mxu0
  %v228 = vpop.f32.mrb[0].mxu0
  %v229 = vadd.f32 %v64, %v228
  %v230 = vpop.f32.mrb[0].mxu0
  %231 = vmatprep.mubr.bf16.mxu0 0
  %232 = vmatmul.mubr.bf16.gmra.mrb[0].mxu0 %v141
  %v233 = vpop.f32.mrb[0].mxu0
  %v234 = vadd.f32 %v64, %v233
  %v235 = vpop.f32.mrb[0].mxu0
  %v236 = vpop.f32.mrb[0].mxu0
  %v237 = vadd.f32 %v64, %v236
  %v238 = vpop.f32.mrb[0].mxu0
  %239 = vdwg.mxu0
  %v240 = vmax.f32 %v178, 0.0
  %v241 = vmax.f32 %v181, 0.0
  %v242 = vmax.f32 %v186, 0.0
  %v243 = vmax.f32 %v189, 0.0
  %v244 = vmax.f32 %v194, 0.0
  %v245 = vmax.f32 %v197, 0.0
  %v246 = vmax.f32 %v202, 0.0
  %v247 = vmax.f32 %v205, 0.0
  %v248 = vmax.f32 %v210, 0.0
  %v249 = vmax.f32 %v213, 0.0
  %v250 = vmax.f32 %v218, 0.0
  %v251 = vmax.f32 %v221, 0.0
  %v252 = vmax.f32 %v226, 0.0
  %v253 = vmax.f32 %v229, 0.0
  %v254 = vmax.f32 %v234, 0.0
  %v255 = vmax.f32 %v237, 0.0
  %v256 = vmul.f32 %v240, %v240
  %v257 = vmul.f32 %v241, %v241
  %v258 = vmul.f32 %v242, %v242
  %v259 = vmul.f32 %v243, %v243
  %v260 = vmul.f32 %v244, %v244
  %v261 = vmul.f32 %v245, %v245
  %v262 = vmul.f32 %v246, %v246
  %v263 = vmul.f32 %v247, %v247
  %v264 = vmul.f32 %v248, %v248
  %v265 = vmul.f32 %v249, %v249
  %v266 = vmul.f32 %v250, %v250
  %v267 = vmul.f32 %v251, %v251
  %v268 = vmul.f32 %v252, %v252
  %v269 = vmul.f32 %v253, %v253
  %v270 = vmul.f32 %v254, %v254
  %v271 = vmul.f32 %v255, %v255
  %v272 = vmul.f32 %v256, %v240
  %v273 = vmul.f32 %v257, %v241
  %v274 = vmul.f32 %v258, %v242
  %v275 = vmul.f32 %v259, %v243
  %v276 = vmul.f32 %v260, %v244
  %v277 = vmul.f32 %v261, %v245
  %v278 = vmul.f32 %v262, %v246
  %v279 = vmul.f32 %v263, %v247
  %v280 = vmul.f32 %v264, %v248
  %v281 = vmul.f32 %v265, %v249
  %v282 = vmul.f32 %v266, %v250
  %v283 = vmul.f32 %v267, %v251
  %v284 = vmul.f32 %v268, %v252
  %v285 = vmul.f32 %v269, %v253
  %v286 = vmul.f32 %v270, %v254
  %v287 = vmul.f32 %v271, %v255
  %v288 = vmul.f32 %v272, %v272
  %v289 = vmul.f32 %v273, %v273
  %v290 = vmul.f32 %v274, %v274
  %v291 = vmul.f32 %v275, %v275
  %v292 = vmul.f32 %v276, %v276
  %v293 = vmul.f32 %v277, %v277
  %v294 = vmul.f32 %v278, %v278
  %v295 = vmul.f32 %v279, %v279
  %v296 = vmul.f32 %v280, %v280
  %v297 = vmul.f32 %v281, %v281
  %v298 = vmul.f32 %v282, %v282
  %v299 = vmul.f32 %v283, %v283
  %v300 = vmul.f32 %v284, %v284
  %v301 = vmul.f32 %v285, %v285
  %v302 = vmul.f32 %v286, %v286
  %v303 = vmul.f32 %v287, %v287
  %v304 = vld [vmem:[%s4] sm:$0x3]
  %305 = vmatprep.subr.mxu0 0.0
  %306 = vmatpush1.msra.mxu0 %v256
  %307 = vmatprep.subr.mxu0 0.0
  %308 = vmatpush1.msra.mxu0 %v257
  %309 = vmatprep.subr.mxu0 0.0
  %310 = vmatpush1.msra.mxu0 %v258
  %311 = vmatprep.subr.mxu0 0.0
  %312 = vmatpush1.msra.mxu0 %v259
  %313 = vmatprep.subr.mxu0 0.0
  %314 = vmatpush1.msra.mxu0 %v260
  %315 = vmatprep.subr.mxu0 0.0
  %316 = vmatpush1.msra.mxu0 %v261
  %317 = vmatprep.subr.mxu0 0.0
  %318 = vmatpush1.msra.mxu0 %v262
  %319 = vmatprep.subr.mxu0 0.0
  %320 = vmatpush1.msra.mxu0 %v263
  %321 = vmatprep.subr.mxu0 0.0
  %322 = vmatpush1.msra.mxu0 %v264
  %323 = vmatprep.subr.mxu0 0.0
  %324 = vmatpush1.msra.mxu0 %v265
  %325 = vmatprep.subr.mxu0 0.0
  %326 = vmatpush1.msra.mxu0 %v266
  %327 = vmatprep.subr.mxu0 0.0
  %328 = vmatpush1.msra.mxu0 %v267
  %329 = vmatprep.subr.mxu0 0.0
  %330 = vmatpush1.msra.mxu0 %v268
  %331 = vmatprep.subr.mxu0 0.0
  %332 = vmatpush1.msra.mxu0 %v269
  %333 = vmatprep.subr.mxu0 0.0
  %334 = vmatpush1.msra.mxu0 %v270
  %335 = vmatprep.subr.mxu0 0.0
  %336 = vmatpush1.msra.mxu0 %v271
  %337 = vmatprep.subr.mxu0 0.0
  %338 = vmatpush1.msra.mxu0 0.0
  %339 = vmatprep.subr.mxu0 0.0
  %340 = vmatpush1.msra.mxu0 0.0
  %341 = vmatprep.subr.mxu0 0.0
  %342 = vmatpush1.msra.mxu0 0.0
  %343 = vmatprep.subr.mxu0 0.0
  %344 = vmatpush1.msra.mxu0 0.0
  %345 = vmatprep.subr.mxu0 0.0
  %346 = vmatpush1.msra.mxu0 0.0
  %347 = vmatprep.subr.mxu0 0.0
  %348 = vmatpush1.msra.mxu0 0.0
  %349 = vmatprep.subr.mxu0 0.0
  %350 = vmatpush1.msra.mxu0 0.0
  %351 = vmatprep.subr.mxu0 0.0
  %352 = vmatpush1.msra.mxu0 0.0
  %353 = vmatprep.subr.mxu0 0.0
  %354 = vmatpush1.msra.mxu0 0.0
  %355 = vmatprep.subr.mxu0 0.0
  %356 = vmatpush1.msra.mxu0 0.0
  %357 = vmatprep.subr.mxu0 0.0
  %358 = vmatpush1.msra.mxu0 0.0
  %359 = vmatprep.subr.mxu0 0.0
  %360 = vmatpush1.msra.mxu0 0.0
  %361 = vmatprep.subr.mxu0 0.0
  %362 = vmatpush1.msra.mxu0 0.0
  %363 = vmatprep.subr.mxu0 0.0
  %364 = vmatpush1.msra.mxu0 0.0
  %365 = vmatprep.subr.mxu0 0.0
  %366 = vmatpush1.msra.mxu0 0.0
  %367 = vmatprep.subr.mxu0 0.0
  %368 = vmatpush1.msra.mxu0 0.0
  %369 = vmatprep.mubr.f32.mxu0 0.0
  %370 = vmatmul.mubr.f32.gmra.mrb[0].mxu0 %v304
  %v371 = vpop.f32.mrb[0].mxu0
  %v372 = vadd.f32 0.0, %v371
  %v373 = vpop.f32.mrb[0].mxu0
  %374 = vdwg.mxu0
  %375 = vmatprep.subr.mxu0 0.0
  %376 = vmatpush1.msra.mxu0 %v288
  %377 = vmatprep.subr.mxu0 0.0
  %378 = vmatpush1.msra.mxu0 %v289
  %379 = vmatprep.subr.mxu0 0.0
  %380 = vmatpush1.msra.mxu0 %v290
  %381 = vmatprep.subr.mxu0 0.0
  %382 = vmatpush1.msra.mxu0 %v291
  %383 = vmatprep.subr.mxu0 0.0
  %384 = vmatpush1.msra.mxu0 %v292
  %385 = vmatprep.subr.mxu0 0.0
  %386 = vmatpush1.msra.mxu0 %v293
  %387 = vmatprep.subr.mxu0 0.0
  %388 = vmatpush1.msra.mxu0 %v294
  %389 = vmatprep.subr.mxu0 0.0
  %390 = vmatpush1.msra.mxu0 %v295
  %391 = vmatprep.subr.mxu0 0.0
  %392 = vmatpush1.msra.mxu0 %v296
  %393 = vmatprep.subr.mxu0 0.0
  %394 = vmatpush1.msra.mxu0 %v297
  %395 = vmatprep.subr.mxu0 0.0
  %396 = vmatpush1.msra.mxu0 %v298
  %397 = vmatprep.subr.mxu0 0.0
  %398 = vmatpush1.msra.mxu0 %v299
  %399 = vmatprep.subr.mxu0 0.0
  %400 = vmatpush1.msra.mxu0 %v300
  %401 = vmatprep.subr.mxu0 0.0
  %402 = vmatpush1.msra.mxu0 %v301
  %403 = vmatprep.subr.mxu0 0.0
  %404 = vmatpush1.msra.mxu0 %v302
  %405 = vmatprep.subr.mxu0 0.0
  %406 = vmatpush1.msra.mxu0 %v303
  %407 = vmatprep.subr.mxu0 0.0
  %408 = vmatpush1.msra.mxu0 0.0
  %409 = vmatprep.subr.mxu0 0.0
  %410 = vmatpush1.msra.mxu0 0.0
  %411 = vmatprep.subr.mxu0 0.0
  %412 = vmatpush1.msra.mxu0 0.0
  %413 = vmatprep.subr.mxu0 0.0
  %414 = vmatpush1.msra.mxu0 0.0
  %415 = vmatprep.subr.mxu0 0.0
  %416 = vmatpush1.msra.mxu0 0.0
  %417 = vmatprep.subr.mxu0 0.0
  %418 = vmatpush1.msra.mxu0 0.0
  %419 = vmatprep.subr.mxu0 0.0
  %420 = vmatpush1.msra.mxu0 0.0
  %421 = vmatprep.subr.mxu0 0.0
  %422 = vmatpush1.msra.mxu0 0.0
  %423 = vmatprep.subr.mxu0 0.0
  %424 = vmatpush1.msra.mxu0 0.0
  %425 = vmatprep.subr.mxu0 0.0
  %426 = vmatpush1.msra.mxu0 0.0
  %427 = vmatprep.subr.mxu0 0.0
  %428 = vmatpush1.msra.mxu0 0.0
  %429 = vmatprep.subr.mxu0 0.0
  %430 = vmatpush1.msra.mxu0 0.0
  %431 = vmatprep.subr.mxu0 0.0
  %432 = vmatpush1.msra.mxu0 0.0
  %433 = vmatprep.subr.mxu0 0.0
  %434 = vmatpush1.msra.mxu0 0.0
  %435 = vmatprep.subr.mxu0 0.0
  %436 = vmatpush1.msra.mxu0 0.0
  %437 = vmatprep.subr.mxu0 0.0
  %438 = vmatpush1.msra.mxu0 0.0
  %439 = vmatprep.mubr.f32.mxu0 0.0
  %440 = vmatmul.mubr.f32.gmra.mrb[0].mxu0 %v304
  %v441 = vpop.f32.mrb[0].mxu0
  %v442 = vadd.f32 0.0, %v441
  %v443 = vpop.f32.mrb[0].mxu0
  %444 = vdwg.mxu0
  %v445 = vld [vmem:[%s5] sm:$0xff]
  %v446 = vld [vmem:[%s5 + $0x8] sm:$0xff]
  %v447 = vld [vmem:[%s5 + $0x10] sm:$0xff]
  %v448 = vld [vmem:[%s5 + $0x18] sm:$0xff]
  %v449 = vld [vmem:[%s5 + $0x20] sm:$0xff]
  %v450 = vld [vmem:[%s5 + $0x28] sm:$0xff]
  %v451 = vld [vmem:[%s5 + $0x30] sm:$0xff]
  %v452 = vld [vmem:[%s5 + $0x38] sm:$0xff]
  %vm453 = vcmask 523264
  %v455 = vsel %vm453, %v372, 0
  %457 = vmatprep.subr.mxu0 0.0
  %458 = vmatpush1.msra.mxu0 %v445
  %459 = vmatprep.subr.mxu0 0.0
  %460 = vmatpush1.msra.mxu0 %v446
  %461 = vmatprep.subr.mxu0 0.0
  %462 = vmatpush1.msra.mxu0 %v447
  %463 = vmatprep.subr.mxu0 0.0
  %464 = vmatpush1.msra.mxu0 %v448
  %465 = vmatprep.subr.mxu0 0.0
  %466 = vmatpush1.msra.mxu0 %v449
  %467 = vmatprep.subr.mxu0 0.0
  %468 = vmatpush1.msra.mxu0 %v450
  %469 = vmatprep.subr.mxu0 0.0
  %470 = vmatpush1.msra.mxu0 %v451
  %471 = vmatprep.subr.mxu0 0.0
  %472 = vmatpush1.msra.mxu0 %v452
  %473 = vmatprep.subr.mxu0 0.0
  %474 = vmatpush1.msra.mxu0 0.0
  %475 = vmatprep.subr.mxu0 0.0
  %476 = vmatpush1.msra.mxu0 0.0
  %477 = vmatprep.subr.mxu0 0.0
  %478 = vmatpush1.msra.mxu0 0.0
  %479 = vmatprep.subr.mxu0 0.0
  %480 = vmatpush1.msra.mxu0 0.0
  %481 = vmatprep.subr.mxu0 0.0
  %482 = vmatpush1.msra.mxu0 0.0
  %483 = vmatprep.subr.mxu0 0.0
  %484 = vmatpush1.msra.mxu0 0.0
  %485 = vmatprep.subr.mxu0 0.0
  %486 = vmatpush1.msra.mxu0 0.0
  %487 = vmatprep.subr.mxu0 0.0
  %488 = vmatpush1.msra.mxu0 0.0
  %489 = vmatprep.subr.mxu0 0.0
  %490 = vmatpush1.msra.mxu0 0.0
  %491 = vmatprep.subr.mxu0 0.0
  %492 = vmatpush1.msra.mxu0 0.0
  %493 = vmatprep.subr.mxu0 0.0
  %494 = vmatpush1.msra.mxu0 0.0
  %495 = vmatprep.subr.mxu0 0.0
  %496 = vmatpush1.msra.mxu0 0.0
  %497 = vmatprep.subr.mxu0 0.0
  %498 = vmatpush1.msra.mxu0 0.0
  %499 = vmatprep.subr.mxu0 0.0
  %500 = vmatpush1.msra.mxu0 0.0
  %501 = vmatprep.subr.mxu0 0.0
  %502 = vmatpush1.msra.mxu0 0.0
  %503 = vmatprep.subr.mxu0 0.0
  %504 = vmatpush1.msra.mxu0 0.0
  %505 = vmatprep.subr.mxu0 0.0
  %506 = vmatpush1.msra.mxu0 0.0
  %507 = vmatprep.subr.mxu0 0.0
  %508 = vmatpush1.msra.mxu0 0.0
  %509 = vmatprep.subr.mxu0 0.0
  %510 = vmatpush1.msra.mxu0 0.0
  %511 = vmatprep.subr.mxu0 0.0
  %512 = vmatpush1.msra.mxu0 0.0
  %513 = vmatprep.subr.mxu0 0.0
  %514 = vmatpush1.msra.mxu0 0.0
  %515 = vmatprep.subr.mxu0 0.0
  %516 = vmatpush1.msra.mxu0 0.0
  %517 = vmatprep.subr.mxu0 0.0
  %518 = vmatpush1.msra.mxu0 0.0
  %519 = vmatprep.subr.mxu0 0.0
  %520 = vmatpush1.msra.mxu0 0.0
  %521 = vmatprep.mubr.f32.mxu0 0.0
  %522 = vmatmul.mubr.f32.gmra.mrb[0].mxu0 %v455
  %v523 = vpop.f32.mrb[0].mxu0
  %v524 = vadd.f32 0.0, %v523
  %v525 = vpop.f32.mrb[0].mxu0
  %526 = vdwg.mxu0
  %v528 = vsel %vm453, %v442, 0
  %530 = vmatprep.subr.mxu0 0.0
  %531 = vmatpush1.msra.mxu0 %v445
  %532 = vmatprep.subr.mxu0 0.0
  %533 = vmatpush1.msra.mxu0 %v446
  %534 = vmatprep.subr.mxu0 0.0
  %535 = vmatpush1.msra.mxu0 %v447
  %536 = vmatprep.subr.mxu0 0.0
  %537 = vmatpush1.msra.mxu0 %v448
  %538 = vmatprep.subr.mxu0 0.0
  %539 = vmatpush1.msra.mxu0 %v449
  %540 = vmatprep.subr.mxu0 0.0
  %541 = vmatpush1.msra.mxu0 %v450
  %542 = vmatprep.subr.mxu0 0.0
  %543 = vmatpush1.msra.mxu0 %v451
  %544 = vmatprep.subr.mxu0 0.0
  %545 = vmatpush1.msra.mxu0 %v452
  %546 = vmatprep.subr.mxu0 0.0
  %547 = vmatpush1.msra.mxu0 0.0
  %548 = vmatprep.subr.mxu0 0.0
  %549 = vmatpush1.msra.mxu0 0.0
  %550 = vmatprep.subr.mxu0 0.0
  %551 = vmatpush1.msra.mxu0 0.0
  %552 = vmatprep.subr.mxu0 0.0
  %553 = vmatpush1.msra.mxu0 0.0
  %554 = vmatprep.subr.mxu0 0.0
  %555 = vmatpush1.msra.mxu0 0.0
  %556 = vmatprep.subr.mxu0 0.0
  %557 = vmatpush1.msra.mxu0 0.0
  %558 = vmatprep.subr.mxu0 0.0
  %559 = vmatpush1.msra.mxu0 0.0
  %560 = vmatprep.subr.mxu0 0.0
  %561 = vmatpush1.msra.mxu0 0.0
  %562 = vmatprep.subr.mxu0 0.0
  %563 = vmatpush1.msra.mxu0 0.0
  %564 = vmatprep.subr.mxu0 0.0
  %565 = vmatpush1.msra.mxu0 0.0
  %566 = vmatprep.subr.mxu0 0.0
  %567 = vmatpush1.msra.mxu0 0.0
  %568 = vmatprep.subr.mxu0 0.0
  %569 = vmatpush1.msra.mxu0 0.0
  %570 = vmatprep.subr.mxu0 0.0
  %571 = vmatpush1.msra.mxu0 0.0
  %572 = vmatprep.subr.mxu0 0.0
  %573 = vmatpush1.msra.mxu0 0.0
  %574 = vmatprep.subr.mxu0 0.0
  %575 = vmatpush1.msra.mxu0 0.0
  %576 = vmatprep.subr.mxu0 0.0
  %577 = vmatpush1.msra.mxu0 0.0
  %578 = vmatprep.subr.mxu0 0.0
  %579 = vmatpush1.msra.mxu0 0.0
  %580 = vmatprep.subr.mxu0 0.0
  %581 = vmatpush1.msra.mxu0 0.0
  %582 = vmatprep.subr.mxu0 0.0
  %583 = vmatpush1.msra.mxu0 0.0
  %584 = vmatprep.subr.mxu0 0.0
  %585 = vmatpush1.msra.mxu0 0.0
  %586 = vmatprep.subr.mxu0 0.0
  %587 = vmatpush1.msra.mxu0 0.0
  %588 = vmatprep.subr.mxu0 0.0
  %589 = vmatpush1.msra.mxu0 0.0
  %590 = vmatprep.subr.mxu0 0.0
  %591 = vmatpush1.msra.mxu0 0.0
  %592 = vmatprep.subr.mxu0 0.0
  %593 = vmatpush1.msra.mxu0 0.0
  %594 = vmatprep.mubr.f32.mxu0 0.0
  %595 = vmatmul.mubr.f32.gmra.mrb[0].mxu0 %v528
  %v596 = vpop.f32.mrb[0].mxu0
  %v597 = vadd.f32 0.0, %v596
  %v598 = vpop.f32.mrb[0].mxu0
  %599 = vdwg.mxu0
  %v600 = vrsqrt.pop %v524
  %v601 = vmul.f32 %v524, %v600
  %vm602 = vcmp.eq.f32.partialorder %v524, inf
  %v603 = vsel %vm602, %v524, %v601
  %vm604 = vcmp.eq.f32.partialorder %v524, 0.0
  %v605 = vand.u32 %v524, 2147483648
  %v606 = vsel %vm604, %v605, %v603
  %v607 = vrsqrt.pop %v597
  %v608 = vmul.f32 %v606, %v607
  %v609 = vld [vmem:[%s6] sm:$0x3f]
  %vm610 = vcmask 48128
  %v612 = vsel %vm610, %v608, 0
  %vm614 = vcmask 1045504
  %v616 = vsel %vm614, %v609, 0
  %618 = vmatprep.subr.mxu0 0.0
  %619 = vmatpush1.msra.mxu0 %v616
  %620 = vmatprep.subr.mxu0 0.0
  %621 = vmatpush1.msra.mxu0 0.0
  %622 = vmatprep.subr.mxu0 0.0
  %623 = vmatpush1.msra.mxu0 0.0
  %624 = vmatprep.subr.mxu0 0.0
  %625 = vmatpush1.msra.mxu0 0.0
  %626 = vmatprep.subr.mxu0 0.0
  %627 = vmatpush1.msra.mxu0 0.0
  %628 = vmatprep.subr.mxu0 0.0
  %629 = vmatpush1.msra.mxu0 0.0
  %630 = vmatprep.subr.mxu0 0.0
  %631 = vmatpush1.msra.mxu0 0.0
  %632 = vmatprep.subr.mxu0 0.0
  %633 = vmatpush1.msra.mxu0 0.0
  %634 = vmatprep.subr.mxu0 0.0
  %635 = vmatpush1.msra.mxu0 0.0
  %636 = vmatprep.subr.mxu0 0.0
  %637 = vmatpush1.msra.mxu0 0.0
  %638 = vmatprep.subr.mxu0 0.0
  %639 = vmatpush1.msra.mxu0 0.0
  %640 = vmatprep.subr.mxu0 0.0
  %641 = vmatpush1.msra.mxu0 0.0
  %642 = vmatprep.subr.mxu0 0.0
  %643 = vmatpush1.msra.mxu0 0.0
  %644 = vmatprep.subr.mxu0 0.0
  %645 = vmatpush1.msra.mxu0 0.0
  %646 = vmatprep.subr.mxu0 0.0
  %647 = vmatpush1.msra.mxu0 0.0
  %648 = vmatprep.subr.mxu0 0.0
  %649 = vmatpush1.msra.mxu0 0.0
  %650 = vmatprep.subr.mxu0 0.0
  %651 = vmatpush1.msra.mxu0 0.0
  %652 = vmatprep.subr.mxu0 0.0
  %653 = vmatpush1.msra.mxu0 0.0
  %654 = vmatprep.subr.mxu0 0.0
  %655 = vmatpush1.msra.mxu0 0.0
  %656 = vmatprep.subr.mxu0 0.0
  %657 = vmatpush1.msra.mxu0 0.0
  %658 = vmatprep.subr.mxu0 0.0
  %659 = vmatpush1.msra.mxu0 0.0
  %660 = vmatprep.subr.mxu0 0.0
  %661 = vmatpush1.msra.mxu0 0.0
  %662 = vmatprep.subr.mxu0 0.0
  %663 = vmatpush1.msra.mxu0 0.0
  %664 = vmatprep.subr.mxu0 0.0
  %665 = vmatpush1.msra.mxu0 0.0
  %666 = vmatprep.subr.mxu0 0.0
  %667 = vmatpush1.msra.mxu0 0.0
  %668 = vmatprep.subr.mxu0 0.0
  %669 = vmatpush1.msra.mxu0 0.0
  %670 = vmatprep.subr.mxu0 0.0
  %671 = vmatpush1.msra.mxu0 0.0
  %672 = vmatprep.subr.mxu0 0.0
  %673 = vmatpush1.msra.mxu0 0.0
  %674 = vmatprep.subr.mxu0 0.0
  %675 = vmatpush1.msra.mxu0 0.0
  %676 = vmatprep.subr.mxu0 0.0
  %677 = vmatpush1.msra.mxu0 0.0
  %678 = vmatprep.subr.mxu0 0.0
  %679 = vmatpush1.msra.mxu0 0.0
  %680 = vmatprep.subr.mxu0 0.0
  %681 = vmatpush1.msra.mxu0 0.0
  %682 = vmatprep.mubr.f32.mxu0 0.0
  %683 = vmatmul.mubr.f32.gmra.mrb[0].mxu0 %v612
  %v684 = vpop.f32.mrb[0].mxu0
  %v685 = vadd.f32 0.0, %v684
  %v686 = vpop.f32.mrb[0].mxu0
  %687 = vdwg.mxu0
  %689 = vrot.lane.b32.xlu0 %v685, 96
  %v690 = vpop.permute.xlu0 %689
  %v692 = vmul.f32 %v685, %v690
  %vm693 = vcmask 130048
  %694 = vst.msk [vmem:[#allocation2] sm:$0xff] %vm693, 0.0
  %695 = vst.msk [vmem:[#allocation2 + $0x8] sm:$0xff] %vm693, 0.0
  %696 = vst.msk [vmem:[#allocation2 + $0x10] sm:$0xff] %vm693, 0.0
  %697 = vst.msk [vmem:[#allocation2 + $0x18] sm:$0xff] %vm693, 0.0
  %698 = vst.msk [vmem:[#allocation2 + $0x20] sm:$0xff] %vm693, 0.0
  %699 = vst.msk [vmem:[#allocation2 + $0x28] sm:$0xff] %vm693, 0.0
  %700 = vst.msk [vmem:[#allocation2 + $0x30] sm:$0xff] %vm693, 0.0
  %701 = vst.msk [vmem:[#allocation2 + $0x38] sm:$0xff] %vm693, 0.0
  %702 = vst.msk [vmem:[#allocation2 + $0x40] sm:$0xff] %vm693, 0.0
  %703 = vst.msk [vmem:[#allocation2 + $0x48] sm:$0xff] %vm693, 0.0
  %704 = vst.msk [vmem:[#allocation2 + $0x50] sm:$0xff] %vm693, 0.0
  %705 = vst.msk [vmem:[#allocation2 + $0x58] sm:$0xff] %vm693, 0.0
  %706 = vst.msk [vmem:[#allocation2 + $0x60] sm:$0xff] %vm693, 0.0
  %707 = vst.msk [vmem:[#allocation2 + $0x68] sm:$0xff] %vm693, 0.0
  %708 = vst.msk [vmem:[#allocation2 + $0x70] sm:$0xff] %vm693, 0.0
  %709 = vst.msk [vmem:[#allocation2 + $0x78] sm:$0xff] %vm693, 0.0
  %710 = vst.msk [vmem:[#allocation2 + $0x80] sm:$0xff] %vm693, 0.0
  %711 = vst.msk [vmem:[#allocation2 + $0x88] sm:$0xff] %vm693, 0.0
  %712 = vst.msk [vmem:[#allocation2 + $0x90] sm:$0xff] %vm693, 0.0
  %713 = vst.msk [vmem:[#allocation2 + $0x98] sm:$0xff] %vm693, 0.0
  %730 = vrot.lane.b32.xlu0 %v178, 80
  %v731 = vpop.permute.xlu0 %730
  %732 = vrot.lane.b32.xlu0 %v181, 80
  %v733 = vpop.permute.xlu0 %732
  %734 = vrot.lane.b32.xlu0 %v186, 80
  %v735 = vpop.permute.xlu0 %734
  %736 = vrot.lane.b32.xlu0 %v189, 80
  %v737 = vpop.permute.xlu0 %736
  %738 = vrot.lane.b32.xlu0 %v194, 80
  %v739 = vpop.permute.xlu0 %738
  %740 = vrot.lane.b32.xlu0 %v197, 80
  %v741 = vpop.permute.xlu0 %740
  %742 = vrot.lane.b32.xlu0 %v202, 80
  %v743 = vpop.permute.xlu0 %742
  %744 = vrot.lane.b32.xlu0 %v205, 80
  %v745 = vpop.permute.xlu0 %744
  %746 = vrot.lane.b32.xlu0 %v210, 80
  %v747 = vpop.permute.xlu0 %746
  %748 = vrot.lane.b32.xlu0 %v213, 80
  %v749 = vpop.permute.xlu0 %748
  %750 = vrot.lane.b32.xlu0 %v218, 80
  %v751 = vpop.permute.xlu0 %750
  %752 = vrot.lane.b32.xlu0 %v221, 80
  %v753 = vpop.permute.xlu0 %752
  %754 = vrot.lane.b32.xlu0 %v226, 80
  %v755 = vpop.permute.xlu0 %754
  %756 = vrot.lane.b32.xlu0 %v229, 80
  %v757 = vpop.permute.xlu0 %756
  %758 = vrot.lane.b32.xlu0 %v234, 80
  %v759 = vpop.permute.xlu0 %758
  %760 = vrot.lane.b32.xlu0 %v237, 80
  %v761 = vpop.permute.xlu0 %760
  %778 = vst.msk [vmem:[#allocation2 + $0x10] sm:$0xff] %vm693, %v731
  %779 = vst.msk [vmem:[#allocation2 + $0x18] sm:$0xff] %vm693, %v733
  %780 = vst.msk [vmem:[#allocation2 + $0x20] sm:$0xff] %vm693, %v735
  %781 = vst.msk [vmem:[#allocation2 + $0x28] sm:$0xff] %vm693, %v737
  %782 = vst.msk [vmem:[#allocation2 + $0x30] sm:$0xff] %vm693, %v739
  %783 = vst.msk [vmem:[#allocation2 + $0x38] sm:$0xff] %vm693, %v741
  %784 = vst.msk [vmem:[#allocation2 + $0x40] sm:$0xff] %vm693, %v743
  %785 = vst.msk [vmem:[#allocation2 + $0x48] sm:$0xff] %vm693, %v745
  %786 = vst.msk [vmem:[#allocation2 + $0x50] sm:$0xff] %vm693, %v747
  %787 = vst.msk [vmem:[#allocation2 + $0x58] sm:$0xff] %vm693, %v749
  %788 = vst.msk [vmem:[#allocation2 + $0x60] sm:$0xff] %vm693, %v751
  %789 = vst.msk [vmem:[#allocation2 + $0x68] sm:$0xff] %vm693, %v753
  %790 = vst.msk [vmem:[#allocation2 + $0x70] sm:$0xff] %vm693, %v755
  %791 = vst.msk [vmem:[#allocation2 + $0x78] sm:$0xff] %vm693, %v757
  %792 = vst.msk [vmem:[#allocation2 + $0x80] sm:$0xff] %vm693, %v759
  %793 = vst.msk [vmem:[#allocation2 + $0x88] sm:$0xff] %vm693, %v761
  %s794 = scalar_lea.vmem %s3, 512
  %v795 = vld [vmem:[%s794] sm:$0xff]
  %v796 = vld [vmem:[%s794 + $0x8] sm:$0xff]
  %v797 = vld [vmem:[%s794 + $0x10] sm:$0xff]
  %v798 = vld [vmem:[%s794 + $0x18] sm:$0xff]
  %v799 = vld [vmem:[%s794 + $0x20] sm:$0xff]
  %v800 = vld [vmem:[%s794 + $0x28] sm:$0xff]
  %v801 = vld [vmem:[%s794 + $0x30] sm:$0xff]
  %v802 = vld [vmem:[%s794 + $0x38] sm:$0xff]
  %v803 = vld [vmem:[%s794 + $0x40] sm:$0xff]
  %v804 = vld [vmem:[%s794 + $0x48] sm:$0xff]
  %v805 = vld [vmem:[%s794 + $0x50] sm:$0xff]
  %v806 = vld [vmem:[%s794 + $0x58] sm:$0xff]
  %v807 = vld [vmem:[%s794 + $0x60] sm:$0xff]
  %v808 = vld [vmem:[%s794 + $0x68] sm:$0xff]
  %v809 = vld [vmem:[%s794 + $0x70] sm:$0xff]
  %v810 = vld [vmem:[%s794 + $0x78] sm:$0xff]
  %827 = vrot.lane.b32.xlu0 %v795, 48
  %v828 = vpop.permute.xlu0 %827
  %829 = vrot.lane.b32.xlu0 %v796, 48
  %v830 = vpop.permute.xlu0 %829
  %831 = vrot.lane.b32.xlu0 %v797, 48
  %v832 = vpop.permute.xlu0 %831
  %833 = vrot.lane.b32.xlu0 %v798, 48
  %v834 = vpop.permute.xlu0 %833
  %835 = vrot.lane.b32.xlu0 %v799, 48
  %v836 = vpop.permute.xlu0 %835
  %837 = vrot.lane.b32.xlu0 %v800, 48
  %v838 = vpop.permute.xlu0 %837
  %839 = vrot.lane.b32.xlu0 %v801, 48
  %v840 = vpop.permute.xlu0 %839
  %841 = vrot.lane.b32.xlu0 %v802, 48
  %v842 = vpop.permute.xlu0 %841
  %843 = vrot.lane.b32.xlu0 %v803, 48
  %v844 = vpop.permute.xlu0 %843
  %845 = vrot.lane.b32.xlu0 %v804, 48
  %v846 = vpop.permute.xlu0 %845
  %847 = vrot.lane.b32.xlu0 %v805, 48
  %v848 = vpop.permute.xlu0 %847
  %849 = vrot.lane.b32.xlu0 %v806, 48
  %v850 = vpop.permute.xlu0 %849
  %851 = vrot.lane.b32.xlu0 %v807, 48
  %v852 = vpop.permute.xlu0 %851
  %853 = vrot.lane.b32.xlu0 %v808, 48
  %v854 = vpop.permute.xlu0 %853
  %855 = vrot.lane.b32.xlu0 %v809, 48
  %v856 = vpop.permute.xlu0 %855
  %857 = vrot.lane.b32.xlu0 %v810, 48
  %v858 = vpop.permute.xlu0 %857
  %v875 = vmul.f32 %v178, %v828
  %v876 = vmul.f32 %v181, %v830
  %v877 = vmul.f32 %v186, %v832
  %v878 = vmul.f32 %v189, %v834
  %v879 = vmul.f32 %v194, %v836
  %v880 = vmul.f32 %v197, %v838
  %v881 = vmul.f32 %v202, %v840
  %v882 = vmul.f32 %v205, %v842
  %v883 = vmul.f32 %v210, %v844
  %v884 = vmul.f32 %v213, %v846
  %v885 = vmul.f32 %v218, %v848
  %v886 = vmul.f32 %v221, %v850
  %v887 = vmul.f32 %v226, %v852
  %v888 = vmul.f32 %v229, %v854
  %v889 = vmul.f32 %v234, %v856
  %v890 = vmul.f32 %v237, %v858
  %v891 = vld [vmem:[#allocation2 + $0x7] sm:$0xff]
  %v892 = vld [vmem:[#allocation2 + $0xf] sm:$0xff]
  %v893 = vld [vmem:[#allocation2 + $0x17] sm:$0xff]
  %v894 = vld [vmem:[#allocation2 + $0x1f] sm:$0xff]
  %v895 = vld [vmem:[#allocation2 + $0x27] sm:$0xff]
  %v896 = vld [vmem:[#allocation2 + $0x2f] sm:$0xff]
  %v897 = vld [vmem:[#allocation2 + $0x37] sm:$0xff]
  %v898 = vld [vmem:[#allocation2 + $0x3f] sm:$0xff]
  %v899 = vld [vmem:[#allocation2 + $0x47] sm:$0xff]
  %v900 = vld [vmem:[#allocation2 + $0x4f] sm:$0xff]
  %v901 = vld [vmem:[#allocation2 + $0x57] sm:$0xff]
  %v902 = vld [vmem:[#allocation2 + $0x5f] sm:$0xff]
  %v903 = vld [vmem:[#allocation2 + $0x67] sm:$0xff]
  %v904 = vld [vmem:[#allocation2 + $0x6f] sm:$0xff]
  %v905 = vld [vmem:[#allocation2 + $0x77] sm:$0xff]
  %v906 = vld [vmem:[#allocation2 + $0x7f] sm:$0xff]
  %v907 = vld [vmem:[%s3] sm:$0xff]
  %v908 = vld [vmem:[%s3 + $0x8] sm:$0xff]
  %v909 = vld [vmem:[%s3 + $0x10] sm:$0xff]
  %v910 = vld [vmem:[%s3 + $0x18] sm:$0xff]
  %v911 = vld [vmem:[%s3 + $0x20] sm:$0xff]
  %v912 = vld [vmem:[%s3 + $0x28] sm:$0xff]
  %v913 = vld [vmem:[%s3 + $0x30] sm:$0xff]
  %v914 = vld [vmem:[%s3 + $0x38] sm:$0xff]
  %v915 = vld [vmem:[%s3 + $0x40] sm:$0xff]
  %v916 = vld [vmem:[%s3 + $0x48] sm:$0xff]
  %v917 = vld [vmem:[%s3 + $0x50] sm:$0xff]
  %v918 = vld [vmem:[%s3 + $0x58] sm:$0xff]
  %v919 = vld [vmem:[%s3 + $0x60] sm:$0xff]
  %v920 = vld [vmem:[%s3 + $0x68] sm:$0xff]
  %v921 = vld [vmem:[%s3 + $0x70] sm:$0xff]
  %v922 = vld [vmem:[%s3 + $0x78] sm:$0xff]
  %v923 = vmul.f32 %v891, %v907
  %v924 = vmul.f32 %v892, %v908
  %v925 = vmul.f32 %v893, %v909
  %v926 = vmul.f32 %v894, %v910
  %v927 = vmul.f32 %v895, %v911
  %v928 = vmul.f32 %v896, %v912
  %v929 = vmul.f32 %v897, %v913
  %v930 = vmul.f32 %v898, %v914
  %v931 = vmul.f32 %v899, %v915
  %v932 = vmul.f32 %v900, %v916
  %v933 = vmul.f32 %v901, %v917
  %v934 = vmul.f32 %v902, %v918
  %v935 = vmul.f32 %v903, %v919
  %v936 = vmul.f32 %v904, %v920
  %v937 = vmul.f32 %v905, %v921
  %v938 = vmul.f32 %v906, %v922
  %955 = vrot.lane.b32.xlu0 %v923, 48
  %v956 = vpop.permute.xlu0 %955
  %957 = vrot.lane.b32.xlu0 %v924, 48
  %v958 = vpop.permute.xlu0 %957
  %959 = vrot.lane.b32.xlu0 %v925, 48
  %v960 = vpop.permute.xlu0 %959
  %961 = vrot.lane.b32.xlu0 %v926, 48
  %v962 = vpop.permute.xlu0 %961
  %963 = vrot.lane.b32.xlu0 %v927, 48
  %v964 = vpop.permute.xlu0 %963
  %965 = vrot.lane.b32.xlu0 %v928, 48
  %v966 = vpop.permute.xlu0 %965
  %967 = vrot.lane.b32.xlu0 %v929, 48
  %v968 = vpop.permute.xlu0 %967
  %969 = vrot.lane.b32.xlu0 %v930, 48
  %v970 = vpop.permute.xlu0 %969
  %971 = vrot.lane.b32.xlu0 %v931, 48
  %v972 = vpop.permute.xlu0 %971
  %973 = vrot.lane.b32.xlu0 %v932, 48
  %v974 = vpop.permute.xlu0 %973
  %975 = vrot.lane.b32.xlu0 %v933, 48
  %v976 = vpop.permute.xlu0 %975
  %977 = vrot.lane.b32.xlu0 %v934, 48
  %v978 = vpop.permute.xlu0 %977
  %979 = vrot.lane.b32.xlu0 %v935, 48
  %v980 = vpop.permute.xlu0 %979
  %981 = vrot.lane.b32.xlu0 %v936, 48
  %v982 = vpop.permute.xlu0 %981
  %983 = vrot.lane.b32.xlu0 %v937, 48
  %v984 = vpop.permute.xlu0 %983
  %985 = vrot.lane.b32.xlu0 %v938, 48
  %v986 = vpop.permute.xlu0 %985
  %v1003 = vadd.f32 %v875, %v956
  %v1004 = vadd.f32 %v876, %v958
  %v1005 = vadd.f32 %v877, %v960
  %v1006 = vadd.f32 %v878, %v962
  %v1007 = vadd.f32 %v879, %v964
  %v1008 = vadd.f32 %v880, %v966
  %v1009 = vadd.f32 %v881, %v968
  %v1010 = vadd.f32 %v882, %v970
  %v1011 = vadd.f32 %v883, %v972
  %v1012 = vadd.f32 %v884, %v974
  %v1013 = vadd.f32 %v885, %v976
  %v1014 = vadd.f32 %v886, %v978
  %v1015 = vadd.f32 %v887, %v980
  %v1016 = vadd.f32 %v888, %v982
  %v1017 = vadd.f32 %v889, %v984
  %v1018 = vadd.f32 %v890, %v986
  %v1019 = vld [vmem:[#allocation2 + $0x8] sm:$0xff]
  %v1020 = vld [vmem:[#allocation2 + $0x10] sm:$0xff]
  %v1021 = vld [vmem:[#allocation2 + $0x18] sm:$0xff]
  %v1022 = vld [vmem:[#allocation2 + $0x20] sm:$0xff]
  %v1023 = vld [vmem:[#allocation2 + $0x28] sm:$0xff]
  %v1024 = vld [vmem:[#allocation2 + $0x30] sm:$0xff]
  %v1025 = vld [vmem:[#allocation2 + $0x38] sm:$0xff]
  %v1026 = vld [vmem:[#allocation2 + $0x40] sm:$0xff]
  %v1027 = vld [vmem:[#allocation2 + $0x48] sm:$0xff]
  %v1028 = vld [vmem:[#allocation2 + $0x50] sm:$0xff]
  %v1029 = vld [vmem:[#allocation2 + $0x58] sm:$0xff]
  %v1030 = vld [vmem:[#allocation2 + $0x60] sm:$0xff]
  %v1031 = vld [vmem:[#allocation2 + $0x68] sm:$0xff]
  %v1032 = vld [vmem:[#allocation2 + $0x70] sm:$0xff]
  %v1033 = vld [vmem:[#allocation2 + $0x78] sm:$0xff]
  %v1034 = vld [vmem:[#allocation2 + $0x80] sm:$0xff]
  %s1035 = scalar_lea.vmem %s3, 128
  %v1036 = vld [vmem:[%s1035] sm:$0xff]
  %v1037 = vld [vmem:[%s1035 + $0x8] sm:$0xff]
  %v1038 = vld [vmem:[%s1035 + $0x10] sm:$0xff]
  %v1039 = vld [vmem:[%s1035 + $0x18] sm:$0xff]
  %v1040 = vld [vmem:[%s1035 + $0x20] sm:$0xff]
  %v1041 = vld [vmem:[%s1035 + $0x28] sm:$0xff]
  %v1042 = vld [vmem:[%s1035 + $0x30] sm:$0xff]
  %v1043 = vld [vmem:[%s1035 + $0x38] sm:$0xff]
  %v1044 = vld [vmem:[%s1035 + $0x40] sm:$0xff]
  %v1045 = vld [vmem:[%s1035 + $0x48] sm:$0xff]
  %v1046 = vld [vmem:[%s1035 + $0x50] sm:$0xff]
  %v1047 = vld [vmem:[%s1035 + $0x58] sm:$0xff]
  %v1048 = vld [vmem:[%s1035 + $0x60] sm:$0xff]
  %v1049 = vld [vmem:[%s1035 + $0x68] sm:$0xff]
  %v1050 = vld [vmem:[%s1035 + $0x70] sm:$0xff]
  %v1051 = vld [vmem:[%s1035 + $0x78] sm:$0xff]
  %v1052 = vmul.f32 %v1019, %v1036
  %v1053 = vmul.f32 %v1020, %v1037
  %v1054 = vmul.f32 %v1021, %v1038
  %v1055 = vmul.f32 %v1022, %v1039
  %v1056 = vmul.f32 %v1023, %v1040
  %v1057 = vmul.f32 %v1024, %v1041
  %v1058 = vmul.f32 %v1025, %v1042
  %v1059 = vmul.f32 %v1026, %v1043
  %v1060 = vmul.f32 %v1027, %v1044
  %v1061 = vmul.f32 %v1028, %v1045
  %v1062 = vmul.f32 %v1029, %v1046
  %v1063 = vmul.f32 %v1030, %v1047
  %v1064 = vmul.f32 %v1031, %v1048
  %v1065 = vmul.f32 %v1032, %v1049
  %v1066 = vmul.f32 %v1033, %v1050
  %v1067 = vmul.f32 %v1034, %v1051
  %1084 = vrot.lane.b32.xlu0 %v1052, 48
  %v1085 = vpop.permute.xlu0 %1084
  %1086 = vrot.lane.b32.xlu0 %v1053, 48
  %v1087 = vpop.permute.xlu0 %1086
  %1088 = vrot.lane.b32.xlu0 %v1054, 48
  %v1089 = vpop.permute.xlu0 %1088
  %1090 = vrot.lane.b32.xlu0 %v1055, 48
  %v1091 = vpop.permute.xlu0 %1090
  %1092 = vrot.lane.b32.xlu0 %v1056, 48
  %v1093 = vpop.permute.xlu0 %1092
  %1094 = vrot.lane.b32.xlu0 %v1057, 48
  %v1095 = vpop.permute.xlu0 %1094
  %1096 = vrot.lane.b32.xlu0 %v1058, 48
  %v1097 = vpop.permute.xlu0 %1096
  %1098 = vrot.lane.b32.xlu0 %v1059, 48
  %v1099 = vpop.permute.xlu0 %1098
  %1100 = vrot.lane.b32.xlu0 %v1060, 48
  %v1101 = vpop.permute.xlu0 %1100
  %1102 = vrot.lane.b32.xlu0 %v1061, 48
  %v1103 = vpop.permute.xlu0 %1102
  %1104 = vrot.lane.b32.xlu0 %v1062, 48
  %v1105 = vpop.permute.xlu0 %1104
  %1106 = vrot.lane.b32.xlu0 %v1063, 48
  %v1107 = vpop.permute.xlu0 %1106
  %1108 = vrot.lane.b32.xlu0 %v1064, 48
  %v1109 = vpop.permute.xlu0 %1108
  %1110 = vrot.lane.b32.xlu0 %v1065, 48
  %v1111 = vpop.permute.xlu0 %1110
  %1112 = vrot.lane.b32.xlu0 %v1066, 48
  %v1113 = vpop.permute.xlu0 %1112
  %1114 = vrot.lane.b32.xlu0 %v1067, 48
  %v1115 = vpop.permute.xlu0 %1114
  %v1132 = vadd.f32 %v1003, %v1085
  %v1133 = vadd.f32 %v1004, %v1087
  %v1134 = vadd.f32 %v1005, %v1089
  %v1135 = vadd.f32 %v1006, %v1091
  %v1136 = vadd.f32 %v1007, %v1093
  %v1137 = vadd.f32 %v1008, %v1095
  %v1138 = vadd.f32 %v1009, %v1097
  %v1139 = vadd.f32 %v1010, %v1099
  %v1140 = vadd.f32 %v1011, %v1101
  %v1141 = vadd.f32 %v1012, %v1103
  %v1142 = vadd.f32 %v1013, %v1105
  %v1143 = vadd.f32 %v1014, %v1107
  %v1144 = vadd.f32 %v1015, %v1109
  %v1145 = vadd.f32 %v1016, %v1111
  %v1146 = vadd.f32 %v1017, %v1113
  %v1147 = vadd.f32 %v1018, %v1115
  %v1148 = vld [vmem:[#allocation2 + $0x9] sm:$0xff]
  %v1149 = vld [vmem:[#allocation2 + $0x11] sm:$0xff]
  %v1150 = vld [vmem:[#allocation2 + $0x19] sm:$0xff]
  %v1151 = vld [vmem:[#allocation2 + $0x21] sm:$0xff]
  %v1152 = vld [vmem:[#allocation2 + $0x29] sm:$0xff]
  %v1153 = vld [vmem:[#allocation2 + $0x31] sm:$0xff]
  %v1154 = vld [vmem:[#allocation2 + $0x39] sm:$0xff]
  %v1155 = vld [vmem:[#allocation2 + $0x41] sm:$0xff]
  %v1156 = vld [vmem:[#allocation2 + $0x49] sm:$0xff]
  %v1157 = vld [vmem:[#allocation2 + $0x51] sm:$0xff]
  %v1158 = vld [vmem:[#allocation2 + $0x59] sm:$0xff]
  %v1159 = vld [vmem:[#allocation2 + $0x61] sm:$0xff]
  %v1160 = vld [vmem:[#allocation2 + $0x69] sm:$0xff]
  %v1161 = vld [vmem:[#allocation2 + $0x71] sm:$0xff]
  %v1162 = vld [vmem:[#allocation2 + $0x79] sm:$0xff]
  %v1163 = vld [vmem:[#allocation2 + $0x81] sm:$0xff]
  %s1164 = scalar_lea.vmem %s3, 256
  %v1165 = vld [vmem:[%s1164] sm:$0xff]
  %v1166 = vld [vmem:[%s1164 + $0x8] sm:$0xff]
  %v1167 = vld [vmem:[%s1164 + $0x10] sm:$0xff]
  %v1168 = vld [vmem:[%s1164 + $0x18] sm:$0xff]
  %v1169 = vld [vmem:[%s1164 + $0x20] sm:$0xff]
  %v1170 = vld [vmem:[%s1164 + $0x28] sm:$0xff]
  %v1171 = vld [vmem:[%s1164 + $0x30] sm:$0xff]
  %v1172 = vld [vmem:[%s1164 + $0x38] sm:$0xff]
  %v1173 = vld [vmem:[%s1164 + $0x40] sm:$0xff]
  %v1174 = vld [vmem:[%s1164 + $0x48] sm:$0xff]
  %v1175 = vld [vmem:[%s1164 + $0x50] sm:$0xff]
  %v1176 = vld [vmem:[%s1164 + $0x58] sm:$0xff]
  %v1177 = vld [vmem:[%s1164 + $0x60] sm:$0xff]
  %v1178 = vld [vmem:[%s1164 + $0x68] sm:$0xff]
  %v1179 = vld [vmem:[%s1164 + $0x70] sm:$0xff]
  %v1180 = vld [vmem:[%s1164 + $0x78] sm:$0xff]
  %v1181 = vmul.f32 %v1148, %v1165
  %v1182 = vmul.f32 %v1149, %v1166
  %v1183 = vmul.f32 %v1150, %v1167
  %v1184 = vmul.f32 %v1151, %v1168
  %v1185 = vmul.f32 %v1152, %v1169
  %v1186 = vmul.f32 %v1153, %v1170
  %v1187 = vmul.f32 %v1154, %v1171
  %v1188 = vmul.f32 %v1155, %v1172
  %v1189 = vmul.f32 %v1156, %v1173
  %v1190 = vmul.f32 %v1157, %v1174
  %v1191 = vmul.f32 %v1158, %v1175
  %v1192 = vmul.f32 %v1159, %v1176
  %v1193 = vmul.f32 %v1160, %v1177
  %v1194 = vmul.f32 %v1161, %v1178
  %v1195 = vmul.f32 %v1162, %v1179
  %v1196 = vmul.f32 %v1163, %v1180
  %1213 = vrot.lane.b32.xlu0 %v1181, 48
  %v1214 = vpop.permute.xlu0 %1213
  %1215 = vrot.lane.b32.xlu0 %v1182, 48
  %v1216 = vpop.permute.xlu0 %1215
  %1217 = vrot.lane.b32.xlu0 %v1183, 48
  %v1218 = vpop.permute.xlu0 %1217
  %1219 = vrot.lane.b32.xlu0 %v1184, 48
  %v1220 = vpop.permute.xlu0 %1219
  %1221 = vrot.lane.b32.xlu0 %v1185, 48
  %v1222 = vpop.permute.xlu0 %1221
  %1223 = vrot.lane.b32.xlu0 %v1186, 48
  %v1224 = vpop.permute.xlu0 %1223
  %1225 = vrot.lane.b32.xlu0 %v1187, 48
  %v1226 = vpop.permute.xlu0 %1225
  %1227 = vrot.lane.b32.xlu0 %v1188, 48
  %v1228 = vpop.permute.xlu0 %1227
  %1229 = vrot.lane.b32.xlu0 %v1189, 48
  %v1230 = vpop.permute.xlu0 %1229
  %1231 = vrot.lane.b32.xlu0 %v1190, 48
  %v1232 = vpop.permute.xlu0 %1231
  %1233 = vrot.lane.b32.xlu0 %v1191, 48
  %v1234 = vpop.permute.xlu0 %1233
  %1235 = vrot.lane.b32.xlu0 %v1192, 48
  %v1236 = vpop.permute.xlu0 %1235
  %1237 = vrot.lane.b32.xlu0 %v1193, 48
  %v1238 = vpop.permute.xlu0 %1237
  %1239 = vrot.lane.b32.xlu0 %v1194, 48
  %v1240 = vpop.permute.xlu0 %1239
  %1241 = vrot.lane.b32.xlu0 %v1195, 48
  %v1242 = vpop.permute.xlu0 %1241
  %1243 = vrot.lane.b32.xlu0 %v1196, 48
  %v1244 = vpop.permute.xlu0 %1243
  %v1261 = vadd.f32 %v1132, %v1214
  %v1262 = vadd.f32 %v1133, %v1216
  %v1263 = vadd.f32 %v1134, %v1218
  %v1264 = vadd.f32 %v1135, %v1220
  %v1265 = vadd.f32 %v1136, %v1222
  %v1266 = vadd.f32 %v1137, %v1224
  %v1267 = vadd.f32 %v1138, %v1226
  %v1268 = vadd.f32 %v1139, %v1228
  %v1269 = vadd.f32 %v1140, %v1230
  %v1270 = vadd.f32 %v1141, %v1232
  %v1271 = vadd.f32 %v1142, %v1234
  %v1272 = vadd.f32 %v1143, %v1236
  %v1273 = vadd.f32 %v1144, %v1238
  %v1274 = vadd.f32 %v1145, %v1240
  %v1275 = vadd.f32 %v1146, %v1242
  %v1276 = vadd.f32 %v1147, %v1244
  %v1277 = vld [vmem:[#allocation2 + $0x87] sm:$0xff]
  %s1278 = scalar_lea.vmem %s3, 384
  %v1279 = vld [vmem:[%s1278] sm:$0xff]
  %v1280 = vld [vmem:[%s1278 + $0x8] sm:$0xff]
  %v1281 = vld [vmem:[%s1278 + $0x10] sm:$0xff]
  %v1282 = vld [vmem:[%s1278 + $0x18] sm:$0xff]
  %v1283 = vld [vmem:[%s1278 + $0x20] sm:$0xff]
  %v1284 = vld [vmem:[%s1278 + $0x28] sm:$0xff]
  %v1285 = vld [vmem:[%s1278 + $0x30] sm:$0xff]
  %v1286 = vld [vmem:[%s1278 + $0x38] sm:$0xff]
  %v1287 = vld [vmem:[%s1278 + $0x40] sm:$0xff]
  %v1288 = vld [vmem:[%s1278 + $0x48] sm:$0xff]
  %v1289 = vld [vmem:[%s1278 + $0x50] sm:$0xff]
  %v1290 = vld [vmem:[%s1278 + $0x58] sm:$0xff]
  %v1291 = vld [vmem:[%s1278 + $0x60] sm:$0xff]
  %v1292 = vld [vmem:[%s1278 + $0x68] sm:$0xff]
  %v1293 = vld [vmem:[%s1278 + $0x70] sm:$0xff]
  %v1294 = vld [vmem:[%s1278 + $0x78] sm:$0xff]
  %v1295 = vmul.f32 %v892, %v1279
  %v1296 = vmul.f32 %v893, %v1280
  %v1297 = vmul.f32 %v894, %v1281
  %v1298 = vmul.f32 %v895, %v1282
  %v1299 = vmul.f32 %v896, %v1283
  %v1300 = vmul.f32 %v897, %v1284
  %v1301 = vmul.f32 %v898, %v1285
  %v1302 = vmul.f32 %v899, %v1286
  %v1303 = vmul.f32 %v900, %v1287
  %v1304 = vmul.f32 %v901, %v1288
  %v1305 = vmul.f32 %v902, %v1289
  %v1306 = vmul.f32 %v903, %v1290
  %v1307 = vmul.f32 %v904, %v1291
  %v1308 = vmul.f32 %v905, %v1292
  %v1309 = vmul.f32 %v906, %v1293
  %v1310 = vmul.f32 %v1277, %v1294
  %1327 = vrot.lane.b32.xlu0 %v1295, 48
  %v1328 = vpop.permute.xlu0 %1327
  %1329 = vrot.lane.b32.xlu0 %v1296, 48
  %v1330 = vpop.permute.xlu0 %1329
  %1331 = vrot.lane.b32.xlu0 %v1297, 48
  %v1332 = vpop.permute.xlu0 %1331
  %1333 = vrot.lane.b32.xlu0 %v1298, 48
  %v1334 = vpop.permute.xlu0 %1333
  %1335 = vrot.lane.b32.xlu0 %v1299, 48
  %v1336 = vpop.permute.xlu0 %1335
  %1337 = vrot.lane.b32.xlu0 %v1300, 48
  %v1338 = vpop.permute.xlu0 %1337
  %1339 = vrot.lane.b32.xlu0 %v1301, 48
  %v1340 = vpop.permute.xlu0 %1339
  %1341 = vrot.lane.b32.xlu0 %v1302, 48
  %v1342 = vpop.permute.xlu0 %1341
  %1343 = vrot.lane.b32.xlu0 %v1303, 48
  %v1344 = vpop.permute.xlu0 %1343
  %1345 = vrot.lane.b32.xlu0 %v1304, 48
  %v1346 = vpop.permute.xlu0 %1345
  %1347 = vrot.lane.b32.xlu0 %v1305, 48
  %v1348 = vpop.permute.xlu0 %1347
  %1349 = vrot.lane.b32.xlu0 %v1306, 48
  %v1350 = vpop.permute.xlu0 %1349
  %1351 = vrot.lane.b32.xlu0 %v1307, 48
  %v1352 = vpop.permute.xlu0 %1351
  %1353 = vrot.lane.b32.xlu0 %v1308, 48
  %v1354 = vpop.permute.xlu0 %1353
  %1355 = vrot.lane.b32.xlu0 %v1309, 48
  %v1356 = vpop.permute.xlu0 %1355
  %1357 = vrot.lane.b32.xlu0 %v1310, 48
  %v1358 = vpop.permute.xlu0 %1357
  %v1375 = vadd.f32 %v1261, %v1328
  %v1376 = vadd.f32 %v1262, %v1330
  %v1377 = vadd.f32 %v1263, %v1332
  %v1378 = vadd.f32 %v1264, %v1334
  %v1379 = vadd.f32 %v1265, %v1336
  %v1380 = vadd.f32 %v1266, %v1338
  %v1381 = vadd.f32 %v1267, %v1340
  %v1382 = vadd.f32 %v1268, %v1342
  %v1383 = vadd.f32 %v1269, %v1344
  %v1384 = vadd.f32 %v1270, %v1346
  %v1385 = vadd.f32 %v1271, %v1348
  %v1386 = vadd.f32 %v1272, %v1350
  %v1387 = vadd.f32 %v1273, %v1352
  %v1388 = vadd.f32 %v1274, %v1354
  %v1389 = vadd.f32 %v1275, %v1356
  %v1390 = vadd.f32 %v1276, %v1358
  %v1391 = vld [vmem:[#allocation2 + $0x89] sm:$0xff]
  %s1392 = scalar_lea.vmem %s3, 640
  %v1393 = vld [vmem:[%s1392] sm:$0xff]
  %v1394 = vld [vmem:[%s1392 + $0x8] sm:$0xff]
  %v1395 = vld [vmem:[%s1392 + $0x10] sm:$0xff]
  %v1396 = vld [vmem:[%s1392 + $0x18] sm:$0xff]
  %v1397 = vld [vmem:[%s1392 + $0x20] sm:$0xff]
  %v1398 = vld [vmem:[%s1392 + $0x28] sm:$0xff]
  %v1399 = vld [vmem:[%s1392 + $0x30] sm:$0xff]
  %v1400 = vld [vmem:[%s1392 + $0x38] sm:$0xff]
  %v1401 = vld [vmem:[%s1392 + $0x40] sm:$0xff]
  %v1402 = vld [vmem:[%s1392 + $0x48] sm:$0xff]
  %v1403 = vld [vmem:[%s1392 + $0x50] sm:$0xff]
  %v1404 = vld [vmem:[%s1392 + $0x58] sm:$0xff]
  %v1405 = vld [vmem:[%s1392 + $0x60] sm:$0xff]
  %v1406 = vld [vmem:[%s1392 + $0x68] sm:$0xff]
  %v1407 = vld [vmem:[%s1392 + $0x70] sm:$0xff]
  %v1408 = vld [vmem:[%s1392 + $0x78] sm:$0xff]
  %v1409 = vmul.f32 %v1149, %v1393
  %v1410 = vmul.f32 %v1150, %v1394
  %v1411 = vmul.f32 %v1151, %v1395
  %v1412 = vmul.f32 %v1152, %v1396
  %v1413 = vmul.f32 %v1153, %v1397
  %v1414 = vmul.f32 %v1154, %v1398
  %v1415 = vmul.f32 %v1155, %v1399
  %v1416 = vmul.f32 %v1156, %v1400
  %v1417 = vmul.f32 %v1157, %v1401
  %v1418 = vmul.f32 %v1158, %v1402
  %v1419 = vmul.f32 %v1159, %v1403
  %v1420 = vmul.f32 %v1160, %v1404
  %v1421 = vmul.f32 %v1161, %v1405
  %v1422 = vmul.f32 %v1162, %v1406
  %v1423 = vmul.f32 %v1163, %v1407
  %v1424 = vmul.f32 %v1391, %v1408
  %1441 = vrot.lane.b32.xlu0 %v1409, 48
  %v1442 = vpop.permute.xlu0 %1441
  %1443 = vrot.lane.b32.xlu0 %v1410, 48
  %v1444 = vpop.permute.xlu0 %1443
  %1445 = vrot.lane.b32.xlu0 %v1411, 48
  %v1446 = vpop.permute.xlu0 %1445
  %1447 = vrot.lane.b32.xlu0 %v1412, 48
  %v1448 = vpop.permute.xlu0 %1447
  %1449 = vrot.lane.b32.xlu0 %v1413, 48
  %v1450 = vpop.permute.xlu0 %1449
  %1451 = vrot.lane.b32.xlu0 %v1414, 48
  %v1452 = vpop.permute.xlu0 %1451
  %1453 = vrot.lane.b32.xlu0 %v1415, 48
  %v1454 = vpop.permute.xlu0 %1453
  %1455 = vrot.lane.b32.xlu0 %v1416, 48
  %v1456 = vpop.permute.xlu0 %1455
  %1457 = vrot.lane.b32.xlu0 %v1417, 48
  %v1458 = vpop.permute.xlu0 %1457
  %1459 = vrot.lane.b32.xlu0 %v1418, 48
  %v1460 = vpop.permute.xlu0 %1459
  %1461 = vrot.lane.b32.xlu0 %v1419, 48
  %v1462 = vpop.permute.xlu0 %1461
  %1463 = vrot.lane.b32.xlu0 %v1420, 48
  %v1464 = vpop.permute.xlu0 %1463
  %1465 = vrot.lane.b32.xlu0 %v1421, 48
  %v1466 = vpop.permute.xlu0 %1465
  %1467 = vrot.lane.b32.xlu0 %v1422, 48
  %v1468 = vpop.permute.xlu0 %1467
  %1469 = vrot.lane.b32.xlu0 %v1423, 48
  %v1470 = vpop.permute.xlu0 %1469
  %1471 = vrot.lane.b32.xlu0 %v1424, 48
  %v1472 = vpop.permute.xlu0 %1471
  %v1489 = vadd.f32 %v1375, %v1442
  %v1490 = vadd.f32 %v1376, %v1444
  %v1491 = vadd.f32 %v1377, %v1446
  %v1492 = vadd.f32 %v1378, %v1448
  %v1493 = vadd.f32 %v1379, %v1450
  %v1494 = vadd.f32 %v1380, %v1452
  %v1495 = vadd.f32 %v1381, %v1454
  %v1496 = vadd.f32 %v1382, %v1456
  %v1497 = vadd.f32 %v1383, %v1458
  %v1498 = vadd.f32 %v1384, %v1460
  %v1499 = vadd.f32 %v1385, %v1462
  %v1500 = vadd.f32 %v1386, %v1464
  %v1501 = vadd.f32 %v1387, %v1466
  %v1502 = vadd.f32 %v1388, %v1468
  %v1503 = vadd.f32 %v1389, %v1470
  %v1504 = vadd.f32 %v1390, %v1472
  %v1505 = vld [vmem:[#allocation2 + $0x8f] sm:$0xff]
  %s1506 = scalar_lea.vmem %s3, 768
  %v1507 = vld [vmem:[%s1506] sm:$0xff]
  %v1508 = vld [vmem:[%s1506 + $0x8] sm:$0xff]
  %v1509 = vld [vmem:[%s1506 + $0x10] sm:$0xff]
  %v1510 = vld [vmem:[%s1506 + $0x18] sm:$0xff]
  %v1511 = vld [vmem:[%s1506 + $0x20] sm:$0xff]
  %v1512 = vld [vmem:[%s1506 + $0x28] sm:$0xff]
  %v1513 = vld [vmem:[%s1506 + $0x30] sm:$0xff]
  %v1514 = vld [vmem:[%s1506 + $0x38] sm:$0xff]
  %v1515 = vld [vmem:[%s1506 + $0x40] sm:$0xff]
  %v1516 = vld [vmem:[%s1506 + $0x48] sm:$0xff]
  %v1517 = vld [vmem:[%s1506 + $0x50] sm:$0xff]
  %v1518 = vld [vmem:[%s1506 + $0x58] sm:$0xff]
  %v1519 = vld [vmem:[%s1506 + $0x60] sm:$0xff]
  %v1520 = vld [vmem:[%s1506 + $0x68] sm:$0xff]
  %v1521 = vld [vmem:[%s1506 + $0x70] sm:$0xff]
  %v1522 = vld [vmem:[%s1506 + $0x78] sm:$0xff]
  %v1523 = vmul.f32 %v893, %v1507
  %v1524 = vmul.f32 %v894, %v1508
  %v1525 = vmul.f32 %v895, %v1509
  %v1526 = vmul.f32 %v896, %v1510
  %v1527 = vmul.f32 %v897, %v1511
  %v1528 = vmul.f32 %v898, %v1512
  %v1529 = vmul.f32 %v899, %v1513
  %v1530 = vmul.f32 %v900, %v1514
  %v1531 = vmul.f32 %v901, %v1515
  %v1532 = vmul.f32 %v902, %v1516
  %v1533 = vmul.f32 %v903, %v1517
  %v1534 = vmul.f32 %v904, %v1518
  %v1535 = vmul.f32 %v905, %v1519
  %v1536 = vmul.f32 %v906, %v1520
  %v1537 = vmul.f32 %v1277, %v1521
  %v1538 = vmul.f32 %v1505, %v1522
  %1555 = vrot.lane.b32.xlu0 %v1523, 48
  %v1556 = vpop.permute.xlu0 %1555
  %1557 = vrot.lane.b32.xlu0 %v1524, 48
  %v1558 = vpop.permute.xlu0 %1557
  %1559 = vrot.lane.b32.xlu0 %v1525, 48
  %v1560 = vpop.permute.xlu0 %1559
  %1561 = vrot.lane.b32.xlu0 %v1526, 48
  %v1562 = vpop.permute.xlu0 %1561
  %1563 = vrot.lane.b32.xlu0 %v1527, 48
  %v1564 = vpop.permute.xlu0 %1563
  %1565 = vrot.lane.b32.xlu0 %v1528, 48
  %v1566 = vpop.permute.xlu0 %1565
  %1567 = vrot.lane.b32.xlu0 %v1529, 48
  %v1568 = vpop.permute.xlu0 %1567
  %1569 = vrot.lane.b32.xlu0 %v1530, 48
  %v1570 = vpop.permute.xlu0 %1569
  %1571 = vrot.lane.b32.xlu0 %v1531, 48
  %v1572 = vpop.permute.xlu0 %1571
  %1573 = vrot.lane.b32.xlu0 %v1532, 48
  %v1574 = vpop.permute.xlu0 %1573
  %1575 = vrot.lane.b32.xlu0 %v1533, 48
  %v1576 = vpop.permute.xlu0 %1575
  %1577 = vrot.lane.b32.xlu0 %v1534, 48
  %v1578 = vpop.permute.xlu0 %1577
  %1579 = vrot.lane.b32.xlu0 %v1535, 48
  %v1580 = vpop.permute.xlu0 %1579
  %1581 = vrot.lane.b32.xlu0 %v1536, 48
  %v1582 = vpop.permute.xlu0 %1581
  %1583 = vrot.lane.b32.xlu0 %v1537, 48
  %v1584 = vpop.permute.xlu0 %1583
  %1585 = vrot.lane.b32.xlu0 %v1538, 48
  %v1586 = vpop.permute.xlu0 %1585
  %v1603 = vadd.f32 %v1489, %v1556
  %v1604 = vadd.f32 %v1490, %v1558
  %v1605 = vadd.f32 %v1491, %v1560
  %v1606 = vadd.f32 %v1492, %v1562
  %v1607 = vadd.f32 %v1493, %v1564
  %v1608 = vadd.f32 %v1494, %v1566
  %v1609 = vadd.f32 %v1495, %v1568
  %v1610 = vadd.f32 %v1496, %v1570
  %v1611 = vadd.f32 %v1497, %v1572
  %v1612 = vadd.f32 %v1498, %v1574
  %v1613 = vadd.f32 %v1499, %v1576
  %v1614 = vadd.f32 %v1500, %v1578
  %v1615 = vadd.f32 %v1501, %v1580
  %v1616 = vadd.f32 %v1502, %v1582
  %v1617 = vadd.f32 %v1503, %v1584
  %v1618 = vadd.f32 %v1504, %v1586
  %v1619 = vld [vmem:[#allocation2 + $0x88] sm:$0xff]
  %v1620 = vld [vmem:[#allocation2 + $0x90] sm:$0xff]
  %s1621 = scalar_lea.vmem %s3, 896
  %v1622 = vld [vmem:[%s1621] sm:$0xff]
  %v1623 = vld [vmem:[%s1621 + $0x8] sm:$0xff]
  %v1624 = vld [vmem:[%s1621 + $0x10] sm:$0xff]
  %v1625 = vld [vmem:[%s1621 + $0x18] sm:$0xff]
  %v1626 = vld [vmem:[%s1621 + $0x20] sm:$0xff]
  %v1627 = vld [vmem:[%s1621 + $0x28] sm:$0xff]
  %v1628 = vld [vmem:[%s1621 + $0x30] sm:$0xff]
  %v1629 = vld [vmem:[%s1621 + $0x38] sm:$0xff]
  %v1630 = vld [vmem:[%s1621 + $0x40] sm:$0xff]
  %v1631 = vld [vmem:[%s1621 + $0x48] sm:$0xff]
  %v1632 = vld [vmem:[%s1621 + $0x50] sm:$0xff]
  %v1633 = vld [vmem:[%s1621 + $0x58] sm:$0xff]
  %v1634 = vld [vmem:[%s1621 + $0x60] sm:$0xff]
  %v1635 = vld [vmem:[%s1621 + $0x68] sm:$0xff]
  %v1636 = vld [vmem:[%s1621 + $0x70] sm:$0xff]
  %v1637 = vld [vmem:[%s1621 + $0x78] sm:$0xff]
  %v1638 = vmul.f32 %v1021, %v1622
  %v1639 = vmul.f32 %v1022, %v1623
  %v1640 = vmul.f32 %v1023, %v1624
  %v1641 = vmul.f32 %v1024, %v1625
  %v1642 = vmul.f32 %v1025, %v1626
  %v1643 = vmul.f32 %v1026, %v1627
  %v1644 = vmul.f32 %v1027, %v1628
  %v1645 = vmul.f32 %v1028, %v1629
  %v1646 = vmul.f32 %v1029, %v1630
  %v1647 = vmul.f32 %v1030, %v1631
  %v1648 = vmul.f32 %v1031, %v1632
  %v1649 = vmul.f32 %v1032, %v1633
  %v1650 = vmul.f32 %v1033, %v1634
  %v1651 = vmul.f32 %v1034, %v1635
  %v1652 = vmul.f32 %v1619, %v1636
  %v1653 = vmul.f32 %v1620, %v1637
  %1670 = vrot.lane.b32.xlu0 %v1638, 48
  %v1671 = vpop.permute.xlu0 %1670
  %1672 = vrot.lane.b32.xlu0 %v1639, 48
  %v1673 = vpop.permute.xlu0 %1672
  %1674 = vrot.lane.b32.xlu0 %v1640, 48
  %v1675 = vpop.permute.xlu0 %1674
  %1676 = vrot.lane.b32.xlu0 %v1641, 48
  %v1677 = vpop.permute.xlu0 %1676
  %1678 = vrot.lane.b32.xlu0 %v1642, 48
  %v1679 = vpop.permute.xlu0 %1678
  %1680 = vrot.lane.b32.xlu0 %v1643, 48
  %v1681 = vpop.permute.xlu0 %1680
  %1682 = vrot.lane.b32.xlu0 %v1644, 48
  %v1683 = vpop.permute.xlu0 %1682
  %1684 = vrot.lane.b32.xlu0 %v1645, 48
  %v1685 = vpop.permute.xlu0 %1684
  %1686 = vrot.lane.b32.xlu0 %v1646, 48
  %v1687 = vpop.permute.xlu0 %1686
  %1688 = vrot.lane.b32.xlu0 %v1647, 48
  %v1689 = vpop.permute.xlu0 %1688
  %1690 = vrot.lane.b32.xlu0 %v1648, 48
  %v1691 = vpop.permute.xlu0 %1690
  %1692 = vrot.lane.b32.xlu0 %v1649, 48
  %v1693 = vpop.permute.xlu0 %1692
  %1694 = vrot.lane.b32.xlu0 %v1650, 48
  %v1695 = vpop.permute.xlu0 %1694
  %1696 = vrot.lane.b32.xlu0 %v1651, 48
  %v1697 = vpop.permute.xlu0 %1696
  %1698 = vrot.lane.b32.xlu0 %v1652, 48
  %v1699 = vpop.permute.xlu0 %1698
  %1700 = vrot.lane.b32.xlu0 %v1653, 48
  %v1701 = vpop.permute.xlu0 %1700
  %v1718 = vadd.f32 %v1603, %v1671
  %v1719 = vadd.f32 %v1604, %v1673
  %v1720 = vadd.f32 %v1605, %v1675
  %v1721 = vadd.f32 %v1606, %v1677
  %v1722 = vadd.f32 %v1607, %v1679
  %v1723 = vadd.f32 %v1608, %v1681
  %v1724 = vadd.f32 %v1609, %v1683
  %v1725 = vadd.f32 %v1610, %v1685
  %v1726 = vadd.f32 %v1611, %v1687
  %v1727 = vadd.f32 %v1612, %v1689
  %v1728 = vadd.f32 %v1613, %v1691
  %v1729 = vadd.f32 %v1614, %v1693
  %v1730 = vadd.f32 %v1615, %v1695
  %v1731 = vadd.f32 %v1616, %v1697
  %v1732 = vadd.f32 %v1617, %v1699
  %v1733 = vadd.f32 %v1618, %v1701
  %v1734 = vld [vmem:[#allocation2 + $0x91] sm:$0xff]
  %s1735 = scalar_lea.vmem %s3, 1024
  %v1736 = vld [vmem:[%s1735] sm:$0xff]
  %v1737 = vld [vmem:[%s1735 + $0x8] sm:$0xff]
  %v1738 = vld [vmem:[%s1735 + $0x10] sm:$0xff]
  %v1739 = vld [vmem:[%s1735 + $0x18] sm:$0xff]
  %v1740 = vld [vmem:[%s1735 + $0x20] sm:$0xff]
  %v1741 = vld [vmem:[%s1735 + $0x28] sm:$0xff]
  %v1742 = vld [vmem:[%s1735 + $0x30] sm:$0xff]
  %v1743 = vld [vmem:[%s1735 + $0x38] sm:$0xff]
  %v1744 = vld [vmem:[%s1735 + $0x40] sm:$0xff]
  %v1745 = vld [vmem:[%s1735 + $0x48] sm:$0xff]
  %v1746 = vld [vmem:[%s1735 + $0x50] sm:$0xff]
  %v1747 = vld [vmem:[%s1735 + $0x58] sm:$0xff]
  %v1748 = vld [vmem:[%s1735 + $0x60] sm:$0xff]
  %v1749 = vld [vmem:[%s1735 + $0x68] sm:$0xff]
  %v1750 = vld [vmem:[%s1735 + $0x70] sm:$0xff]
  %v1751 = vld [vmem:[%s1735 + $0x78] sm:$0xff]
  %v1752 = vmul.f32 %v1150, %v1736
  %v1753 = vmul.f32 %v1151, %v1737
  %v1754 = vmul.f32 %v1152, %v1738
  %v1755 = vmul.f32 %v1153, %v1739
  %v1756 = vmul.f32 %v1154, %v1740
  %v1757 = vmul.f32 %v1155, %v1741
  %v1758 = vmul.f32 %v1156, %v1742
  %v1759 = vmul.f32 %v1157, %v1743
  %v1760 = vmul.f32 %v1158, %v1744
  %v1761 = vmul.f32 %v1159, %v1745
  %v1762 = vmul.f32 %v1160, %v1746
  %v1763 = vmul.f32 %v1161, %v1747
  %v1764 = vmul.f32 %v1162, %v1748
  %v1765 = vmul.f32 %v1163, %v1749
  %v1766 = vmul.f32 %v1391, %v1750
  %v1767 = vmul.f32 %v1734, %v1751
  %1784 = vrot.lane.b32.xlu0 %v1752, 48
  %v1785 = vpop.permute.xlu0 %1784
  %1786 = vrot.lane.b32.xlu0 %v1753, 48
  %v1787 = vpop.permute.xlu0 %1786
  %1788 = vrot.lane.b32.xlu0 %v1754, 48
  %v1789 = vpop.permute.xlu0 %1788
  %1790 = vrot.lane.b32.xlu0 %v1755, 48
  %v1791 = vpop.permute.xlu0 %1790
  %1792 = vrot.lane.b32.xlu0 %v1756, 48
  %v1793 = vpop.permute.xlu0 %1792
  %1794 = vrot.lane.b32.xlu0 %v1757, 48
  %v1795 = vpop.permute.xlu0 %1794
  %1796 = vrot.lane.b32.xlu0 %v1758, 48
  %v1797 = vpop.permute.xlu0 %1796
  %1798 = vrot.lane.b32.xlu0 %v1759, 48
  %v1799 = vpop.permute.xlu0 %1798
  %1800 = vrot.lane.b32.xlu0 %v1760, 48
  %v1801 = vpop.permute.xlu0 %1800
  %1802 = vrot.lane.b32.xlu0 %v1761, 48
  %v1803 = vpop.permute.xlu0 %1802
  %1804 = vrot.lane.b32.xlu0 %v1762, 48
  %v1805 = vpop.permute.xlu0 %1804
  %1806 = vrot.lane.b32.xlu0 %v1763, 48
  %v1807 = vpop.permute.xlu0 %1806
  %1808 = vrot.lane.b32.xlu0 %v1764, 48
  %v1809 = vpop.permute.xlu0 %1808
  %1810 = vrot.lane.b32.xlu0 %v1765, 48
  %v1811 = vpop.permute.xlu0 %1810
  %1812 = vrot.lane.b32.xlu0 %v1766, 48
  %v1813 = vpop.permute.xlu0 %1812
  %1814 = vrot.lane.b32.xlu0 %v1767, 48
  %v1815 = vpop.permute.xlu0 %1814
  %v1832 = vadd.f32 %v1718, %v1785
  %v1833 = vadd.f32 %v1719, %v1787
  %v1834 = vadd.f32 %v1720, %v1789
  %v1835 = vadd.f32 %v1721, %v1791
  %v1836 = vadd.f32 %v1722, %v1793
  %v1837 = vadd.f32 %v1723, %v1795
  %v1838 = vadd.f32 %v1724, %v1797
  %v1839 = vadd.f32 %v1725, %v1799
  %v1840 = vadd.f32 %v1726, %v1801
  %v1841 = vadd.f32 %v1727, %v1803
  %v1842 = vadd.f32 %v1728, %v1805
  %v1843 = vadd.f32 %v1729, %v1807
  %v1844 = vadd.f32 %v1730, %v1809
  %v1845 = vadd.f32 %v1731, %v1811
  %v1846 = vadd.f32 %v1732, %v1813
  %v1847 = vadd.f32 %v1733, %v1815
  %v1848 = vpack.c.bf16 %v273, %v272
  %v1849 = vpack.c.bf16 %v275, %v274
  %v1850 = vpack.c.bf16 %v277, %v276
  %v1851 = vpack.c.bf16 %v279, %v278
  %v1852 = vpack.c.bf16 %v281, %v280
  %v1853 = vpack.c.bf16 %v283, %v282
  %v1854 = vpack.c.bf16 %v285, %v284
  %v1855 = vpack.c.bf16 %v287, %v286
  %v1856 = vld [vmem:[%s7] sm:$0xff]
  %v1857 = vld [vmem:[%s7 + $0x8] sm:$0xff]
  %v1858 = vld [vmem:[%s7 + $0x10] sm:$0xff]
  %v1859 = vld [vmem:[%s7 + $0x18] sm:$0xff]
  %1868 = vrot.lane.b32.xlu0 %v272, 96
  %v1869 = vpop.permute.xlu0 %1868
  %1870 = vrot.lane.b32.xlu0 %v273, 96
  %v1871 = vpop.permute.xlu0 %1870
  %1872 = vrot.lane.b32.xlu0 %v274, 96
  %v1873 = vpop.permute.xlu0 %1872
  %1874 = vrot.lane.b32.xlu0 %v275, 96
  %v1875 = vpop.permute.xlu0 %1874
  %1876 = vrot.lane.b32.xlu0 %v276, 96
  %v1877 = vpop.permute.xlu0 %1876
  %1878 = vrot.lane.b32.xlu0 %v277, 96
  %v1879 = vpop.permute.xlu0 %1878
  %1880 = vrot.lane.b32.xlu0 %v278, 96
  %v1881 = vpop.permute.xlu0 %1880
  %1882 = vrot.lane.b32.xlu0 %v279, 96
  %v1883 = vpop.permute.xlu0 %1882
  %1892 = vxpose.xlu0.b32.start [1/16] %v1869, 128
  %1893 = vxpose.xlu0.b32.cont [2/16] %v1871, 128
  %1894 = vxpose.xlu0.b32.cont [3/16] %v1873, 128
  %1895 = vxpose.xlu0.b32.cont [4/16] %v1875, 128
  %1896 = vxpose.xlu0.b32.cont [5/16] %v1877, 128
  %1897 = vxpose.xlu0.b32.cont [6/16] %v1879, 128
  %1898 = vxpose.xlu0.b32.cont [7/16] %v1881, 128
  %1899 = vxpose.xlu0.b32.cont [8/16] %v1883, 128
  %1900 = vxpose.xlu0.b32.cont [9/16] 0.0, 128
  %1901 = vxpose.xlu0.b32.cont [10/16] 0.0, 128
  %1902 = vxpose.xlu0.b32.cont [11/16] 0.0, 128
  %1903 = vxpose.xlu0.b32.cont [12/16] 0.0, 128
  %1904 = vxpose.xlu0.b32.cont [13/16] 0.0, 128
  %1905 = vxpose.xlu0.b32.cont [14/16] 0.0, 128
  %1906 = vxpose.xlu0.b32.cont [15/16] 0.0, 128
  %1907 = vxpose.xlu0.b32.end [16/16] 0.0, 128
  %v1908 = vpop.trf.xlu0
  %v1909 = vpop.trf.xlu0
  %v1910 = vpop.trf.xlu0
  %v1911 = vpop.trf.xlu0
  %v1912 = vpop.trf.xlu0
  %v1913 = vpop.trf.xlu0
  %v1914 = vpop.trf.xlu0
  %v1915 = vpop.trf.xlu0
  %v1916 = vpop.trf.xlu0
  %v1917 = vpop.trf.xlu0
  %v1918 = vpop.trf.xlu0
  %v1919 = vpop.trf.xlu0
  %v1920 = vpop.trf.xlu0
  %v1921 = vpop.trf.xlu0
  %v1922 = vpop.trf.xlu0
  %v1923 = vpop.trf.xlu0
  %v1925 = vsel %vm453, %v1908, 0
  %v1928 = vsel %vm453, %v1909, 0
  %1930 = vmatprep.subr.mxu0 0.0
  %1931 = vmatpush1.msra.mxu0 %v731
  %1932 = vmatprep.subr.mxu0 0.0
  %1933 = vmatpush1.msra.mxu0 %v733
  %1934 = vmatprep.subr.mxu0 0.0
  %1935 = vmatpush1.msra.mxu0 %v735
  %1936 = vmatprep.subr.mxu0 0.0
  %1937 = vmatpush1.msra.mxu0 %v737
  %1938 = vmatprep.subr.mxu0 0.0
  %1939 = vmatpush1.msra.mxu0 %v739
  %1940 = vmatprep.subr.mxu0 0.0
  %1941 = vmatpush1.msra.mxu0 %v741
  %1942 = vmatprep.subr.mxu0 0.0
  %1943 = vmatpush1.msra.mxu0 %v743
  %1944 = vmatprep.subr.mxu0 0.0
  %1945 = vmatpush1.msra.mxu0 %v745
  %1946 = vmatprep.subr.mxu0 0.0
  %1947 = vmatpush1.msra.mxu0 0.0
  %1948 = vmatprep.subr.mxu0 0.0
  %1949 = vmatpush1.msra.mxu0 0.0
  %1950 = vmatprep.subr.mxu0 0.0
  %1951 = vmatpush1.msra.mxu0 0.0
  %1952 = vmatprep.subr.mxu0 0.0
  %1953 = vmatpush1.msra.mxu0 0.0
  %1954 = vmatprep.subr.mxu0 0.0
  %1955 = vmatpush1.msra.mxu0 0.0
  %1956 = vmatprep.subr.mxu0 0.0
  %1957 = vmatpush1.msra.mxu0 0.0
  %1958 = vmatprep.subr.mxu0 0.0
  %1959 = vmatpush1.msra.mxu0 0.0
  %1960 = vmatprep.subr.mxu0 0.0
  %1961 = vmatpush1.msra.mxu0 0.0
  %1962 = vmatprep.subr.mxu0 0.0
  %1963 = vmatpush1.msra.mxu0 0.0
  %1964 = vmatprep.subr.mxu0 0.0
  %1965 = vmatpush1.msra.mxu0 0.0
  %1966 = vmatprep.subr.mxu0 0.0
  %1967 = vmatpush1.msra.mxu0 0.0
  %1968 = vmatprep.subr.mxu0 0.0
  %1969 = vmatpush1.msra.mxu0 0.0
  %1970 = vmatprep.subr.mxu0 0.0
  %1971 = vmatpush1.msra.mxu0 0.0
  %1972 = vmatprep.subr.mxu0 0.0
  %1973 = vmatpush1.msra.mxu0 0.0
  %1974 = vmatprep.subr.mxu0 0.0
  %1975 = vmatpush1.msra.mxu0 0.0
  %1976 = vmatprep.subr.mxu0 0.0
  %1977 = vmatpush1.msra.mxu0 0.0
  %1978 = vmatprep.subr.mxu0 0.0
  %1979 = vmatpush1.msra.mxu0 0.0
  %1980 = vmatprep.subr.mxu0 0.0
  %1981 = vmatpush1.msra.mxu0 0.0
  %1982 = vmatprep.subr.mxu0 0.0
  %1983 = vmatpush1.msra.mxu0 0.0
  %1984 = vmatprep.subr.mxu0 0.0
  %1985 = vmatpush1.msra.mxu0 0.0
  %1986 = vmatprep.subr.mxu0 0.0
  %1987 = vmatpush1.msra.mxu0 0.0
  %1988 = vmatprep.subr.mxu0 0.0
  %1989 = vmatpush1.msra.mxu0 0.0
  %1990 = vmatprep.subr.mxu0 0.0
  %1991 = vmatpush1.msra.mxu0 0.0
  %1992 = vmatprep.subr.mxu0 0.0
  %1993 = vmatpush1.msra.mxu0 0.0
  %1994 = vmatprep.mubr.f32.mxu0 0.0
  %1995 = vmatmul.mubr.f32.gmra.mrb[0].mxu0 %v1925
  %v1996 = vpop.f32.mrb[0].mxu0
  %v1997 = vadd.f32 0.0, %v1996
  %v1998 = vpop.f32.mrb[0].mxu0
  %1999 = vmatprep.mubr.f32.mxu0 0.0
  %2000 = vmatmul.mubr.f32.gmra.mrb[0].mxu0 %v1928
  %v2001 = vpop.f32.mrb[0].mxu0
  %v2002 = vadd.f32 0.0, %v2001
  %v2003 = vpop.f32.mrb[0].mxu0
  %2004 = vdwg.mxu0
  %2007 = vrot.lane.b32.xlu0 %v1997, 16
  %v2008 = vpop.permute.xlu0 %2007
  %2009 = vrot.lane.b32.xlu0 %v2002, 16
  %v2010 = vpop.permute.xlu0 %2009
  %v2013 = vsel %vm693, %v1997, %v2008
  %v2014 = vsel %vm693, %v2002, %v2010
  %v2015 = vlaneseq
  %v2016 = vshrl.u32 %v2015, 7
  %v2017 = vsub.s32 0, %v2016
  %v2018 = vrot.slane %v692, %v2017
  %v2019 = vmul.f32 %v1856, %v2018
  %v2020 = vmul.f32 %v1857, %v2018
  %v2021 = vmul.f32 %v1858, %v2018
  %v2022 = vmul.f32 %v1859, %v2018
  %v2023 = vmul.f32 %v2013, %v2019
  %v2024 = vmul.f32 %v2014, %v2020
  %v2025 = vmul.f32 %v2013, %v2021
  %v2026 = vmul.f32 %v2014, %v2022
  %v2027 = vpack.c.bf16 %v2024, %v2023
  %v2028 = vpack.c.bf16 %v2026, %v2025
  %v2030 = vsel %vm118, %v1848, 0
  %v2033 = vsel %vm118, %v1849, 0
  %v2036 = vsel %vm118, %v1850, 0
  %v2039 = vsel %vm118, %v1851, 0
  %2041 = vmatprep.subr.bf16.mxu0 0
  %2042 = vmatpush1.bf16.msra.mxu0 %v2027
  %2043 = vmatprep.subr.bf16.mxu0 0
  %2044 = vmatpush1.bf16.msra.mxu0 %v2028
  %2045 = vmatprep.subr.bf16.mxu0 0
  %2046 = vmatpush1.bf16.msra.mxu0 0
  %2047 = vmatprep.subr.bf16.mxu0 0
  %2048 = vmatpush1.bf16.msra.mxu0 0
  %2049 = vmatprep.subr.bf16.mxu0 0
  %2050 = vmatpush1.bf16.msra.mxu0 0
  %2051 = vmatprep.subr.bf16.mxu0 0
  %2052 = vmatpush1.bf16.msra.mxu0 0
  %2053 = vmatprep.subr.bf16.mxu0 0
  %2054 = vmatpush1.bf16.msra.mxu0 0
  %2055 = vmatprep.subr.bf16.mxu0 0
  %2056 = vmatpush1.bf16.msra.mxu0 0
  %2057 = vmatprep.subr.bf16.mxu0 0
  %2058 = vmatpush1.bf16.msra.mxu0 0
  %2059 = vmatprep.subr.bf16.mxu0 0
  %2060 = vmatpush1.bf16.msra.mxu0 0
  %2061 = vmatprep.subr.bf16.mxu0 0
  %2062 = vmatpush1.bf16.msra.mxu0 0
  %2063 = vmatprep.subr.bf16.mxu0 0
  %2064 = vmatpush1.bf16.msra.mxu0 0
  %2065 = vmatprep.subr.bf16.mxu0 0
  %2066 = vmatpush1.bf16.msra.mxu0 0
  %2067 = vmatprep.subr.bf16.mxu0 0
  %2068 = vmatpush1.bf16.msra.mxu0 0
  %2069 = vmatprep.subr.bf16.mxu0 0
  %2070 = vmatpush1.bf16.msra.mxu0 0
  %2071 = vmatprep.subr.bf16.mxu0 0
  %2072 = vmatpush1.bf16.msra.mxu0 0
  %2073 = vmatprep.mubr.bf16.mxu0 0
  %2074 = vmatmul.mubr.bf16.gmra.mrb[0].mxu0 %v2030
  %v2075 = vpop.f32.mrb[0].mxu0
  %v2076 = vadd.f32 0.0, %v2075
  %v2077 = vpop.f32.mrb[0].mxu0
  %v2078 = vpop.f32.mrb[0].mxu0
  %v2079 = vadd.f32 0.0, %v2078
  %v2080 = vpop.f32.mrb[0].mxu0
  %2081 = vmatprep.mubr.bf16.mxu0 0
  %2082 = vmatmul.mubr.bf16.gmra.mrb[0].mxu0 %v2033
  %v2083 = vpop.f32.mrb[0].mxu0
  %v2084 = vadd.f32 0.0, %v2083
  %v2085 = vpop.f32.mrb[0].mxu0
  %v2086 = vpop.f32.mrb[0].mxu0
  %v2087 = vadd.f32 0.0, %v2086
  %v2088 = vpop.f32.mrb[0].mxu0
  %2089 = vmatprep.mubr.bf16.mxu0 0
  %2090 = vmatmul.mubr.bf16.gmra.mrb[0].mxu0 %v2036
  %v2091 = vpop.f32.mrb[0].mxu0
  %v2092 = vadd.f32 0.0, %v2091
  %v2093 = vpop.f32.mrb[0].mxu0
  %v2094 = vpop.f32.mrb[0].mxu0
  %v2095 = vadd.f32 0.0, %v2094
  %v2096 = vpop.f32.mrb[0].mxu0
  %2097 = vmatprep.mubr.bf16.mxu0 0
  %2098 = vmatmul.mubr.bf16.gmra.mrb[0].mxu0 %v2039
  %v2099 = vpop.f32.mrb[0].mxu0
  %v2100 = vadd.f32 0.0, %v2099
  %v2101 = vpop.f32.mrb[0].mxu0
  %v2102 = vpop.f32.mrb[0].mxu0
  %v2103 = vadd.f32 0.0, %v2102
  %v2104 = vpop.f32.mrb[0].mxu0
  %2105 = vdwg.mxu0
  %2114 = vrot.lane.b32.xlu0 %v280, 96
  %v2115 = vpop.permute.xlu0 %2114
  %2116 = vrot.lane.b32.xlu0 %v281, 96
  %v2117 = vpop.permute.xlu0 %2116
  %2118 = vrot.lane.b32.xlu0 %v282, 96
  %v2119 = vpop.permute.xlu0 %2118
  %2120 = vrot.lane.b32.xlu0 %v283, 96
  %v2121 = vpop.permute.xlu0 %2120
  %2122 = vrot.lane.b32.xlu0 %v284, 96
  %v2123 = vpop.permute.xlu0 %2122
  %2124 = vrot.lane.b32.xlu0 %v285, 96
  %v2125 = vpop.permute.xlu0 %2124
  %2126 = vrot.lane.b32.xlu0 %v286, 96
  %v2127 = vpop.permute.xlu0 %2126
  %2128 = vrot.lane.b32.xlu0 %v287, 96
  %v2129 = vpop.permute.xlu0 %2128
  %2138 = vxpose.xlu0.b32.start [1/16] %v2115, 128
  %2139 = vxpose.xlu0.b32.cont [2/16] %v2117, 128
  %2140 = vxpose.xlu0.b32.cont [3/16] %v2119, 128
  %2141 = vxpose.xlu0.b32.cont [4/16] %v2121, 128
  %2142 = vxpose.xlu0.b32.cont [5/16] %v2123, 128
  %2143 = vxpose.xlu0.b32.cont [6/16] %v2125, 128
  %2144 = vxpose.xlu0.b32.cont [7/16] %v2127, 128
  %2145 = vxpose.xlu0.b32.cont [8/16] %v2129, 128
  %2146 = vxpose.xlu0.b32.cont [9/16] 0.0, 128
  %2147 = vxpose.xlu0.b32.cont [10/16] 0.0, 128
  %2148 = vxpose.xlu0.b32.cont [11/16] 0.0, 128
  %2149 = vxpose.xlu0.b32.cont [12/16] 0.0, 128
  %2150 = vxpose.xlu0.b32.cont [13/16] 0.0, 128
  %2151 = vxpose.xlu0.b32.cont [14/16] 0.0, 128
  %2152 = vxpose.xlu0.b32.cont [15/16] 0.0, 128
  %2153 = vxpose.xlu0.b32.end [16/16] 0.0, 128
  %v2154 = vpop.trf.xlu0
  %v2155 = vpop.trf.xlu0
  %v2156 = vpop.trf.xlu0
  %v2157 = vpop.trf.xlu0
  %v2158 = vpop.trf.xlu0
  %v2159 = vpop.trf.xlu0
  %v2160 = vpop.trf.xlu0
  %v2161 = vpop.trf.xlu0
  %v2162 = vpop.trf.xlu0
  %v2163 = vpop.trf.xlu0
  %v2164 = vpop.trf.xlu0
  %v2165 = vpop.trf.xlu0
  %v2166 = vpop.trf.xlu0
  %v2167 = vpop.trf.xlu0
  %v2168 = vpop.trf.xlu0
  %v2169 = vpop.trf.xlu0
  %v2171 = vsel %vm453, %v2154, 0
  %v2174 = vsel %vm453, %v2155, 0
  %2176 = vmatprep.subr.mxu0 0.0
  %2177 = vmatpush1.msra.mxu0 %v747
  %2178 = vmatprep.subr.mxu0 0.0
  %2179 = vmatpush1.msra.mxu0 %v749
  %2180 = vmatprep.subr.mxu0 0.0
  %2181 = vmatpush1.msra.mxu0 %v751
  %2182 = vmatprep.subr.mxu0 0.0
  %2183 = vmatpush1.msra.mxu0 %v753
  %2184 = vmatprep.subr.mxu0 0.0
  %2185 = vmatpush1.msra.mxu0 %v755
  %2186 = vmatprep.subr.mxu0 0.0
  %2187 = vmatpush1.msra.mxu0 %v757
  %2188 = vmatprep.subr.mxu0 0.0
  %2189 = vmatpush1.msra.mxu0 %v759
  %2190 = vmatprep.subr.mxu0 0.0
  %2191 = vmatpush1.msra.mxu0 %v761
  %2192 = vmatprep.subr.mxu0 0.0
  %2193 = vmatpush1.msra.mxu0 0.0
  %2194 = vmatprep.subr.mxu0 0.0
  %2195 = vmatpush1.msra.mxu0 0.0
  %2196 = vmatprep.subr.mxu0 0.0
  %2197 = vmatpush1.msra.mxu0 0.0
  %2198 = vmatprep.subr.mxu0 0.0
  %2199 = vmatpush1.msra.mxu0 0.0
  %2200 = vmatprep.subr.mxu0 0.0
  %2201 = vmatpush1.msra.mxu0 0.0
  %2202 = vmatprep.subr.mxu0 0.0
  %2203 = vmatpush1.msra.mxu0 0.0
  %2204 = vmatprep.subr.mxu0 0.0
  %2205 = vmatpush1.msra.mxu0 0.0
  %2206 = vmatprep.subr.mxu0 0.0
  %2207 = vmatpush1.msra.mxu0 0.0
  %2208 = vmatprep.subr.mxu0 0.0
  %2209 = vmatpush1.msra.mxu0 0.0
  %2210 = vmatprep.subr.mxu0 0.0
  %2211 = vmatpush1.msra.mxu0 0.0
  %2212 = vmatprep.subr.mxu0 0.0
  %2213 = vmatpush1.msra.mxu0 0.0
  %2214 = vmatprep.subr.mxu0 0.0
  %2215 = vmatpush1.msra.mxu0 0.0
  %2216 = vmatprep.subr.mxu0 0.0
  %2217 = vmatpush1.msra.mxu0 0.0
  %2218 = vmatprep.subr.mxu0 0.0
  %2219 = vmatpush1.msra.mxu0 0.0
  %2220 = vmatprep.subr.mxu0 0.0
  %2221 = vmatpush1.msra.mxu0 0.0
  %2222 = vmatprep.subr.mxu0 0.0
  %2223 = vmatpush1.msra.mxu0 0.0
  %2224 = vmatprep.subr.mxu0 0.0
  %2225 = vmatpush1.msra.mxu0 0.0
  %2226 = vmatprep.subr.mxu0 0.0
  %2227 = vmatpush1.msra.mxu0 0.0
  %2228 = vmatprep.subr.mxu0 0.0
  %2229 = vmatpush1.msra.mxu0 0.0
  %2230 = vmatprep.subr.mxu0 0.0
  %2231 = vmatpush1.msra.mxu0 0.0
  %2232 = vmatprep.subr.mxu0 0.0
  %2233 = vmatpush1.msra.mxu0 0.0
  %2234 = vmatprep.subr.mxu0 0.0
  %2235 = vmatpush1.msra.mxu0 0.0
  %2236 = vmatprep.subr.mxu0 0.0
  %2237 = vmatpush1.msra.mxu0 0.0
  %2238 = vmatprep.subr.mxu0 0.0
  %2239 = vmatpush1.msra.mxu0 0.0
  %2240 = vmatprep.mubr.f32.mxu0 0.0
  %2241 = vmatmul.mubr.f32.gmra.mrb[0].mxu0 %v2171
  %v2242 = vpop.f32.mrb[0].mxu0
  %v2243 = vadd.f32 0.0, %v2242
  %v2244 = vpop.f32.mrb[0].mxu0
  %2245 = vmatprep.mubr.f32.mxu0 0.0
  %2246 = vmatmul.mubr.f32.gmra.mrb[0].mxu0 %v2174
  %v2247 = vpop.f32.mrb[0].mxu0
  %v2248 = vadd.f32 0.0, %v2247
  %v2249 = vpop.f32.mrb[0].mxu0
  %2250 = vdwg.mxu0
  %2253 = vrot.lane.b32.xlu0 %v2243, 16
  %v2254 = vpop.permute.xlu0 %2253
  %2255 = vrot.lane.b32.xlu0 %v2248, 16
  %v2256 = vpop.permute.xlu0 %2255
  %v2259 = vsel %vm693, %v2243, %v2254
  %v2260 = vsel %vm693, %v2248, %v2256
  %v2261 = vlaneseq
  %v2262 = vshrl.u32 %v2261, 7
  %v2263 = vsub.s32 1, %v2262
  %v2264 = vrot.slane %v692, %v2263
  %v2265 = vmul.f32 %v1856, %v2264
  %v2266 = vmul.f32 %v1857, %v2264
  %v2267 = vmul.f32 %v1858, %v2264
  %v2268 = vmul.f32 %v1859, %v2264
  %v2269 = vmul.f32 %v2259, %v2265
  %v2270 = vmul.f32 %v2260, %v2266
  %v2271 = vmul.f32 %v2259, %v2267
  %v2272 = vmul.f32 %v2260, %v2268
  %v2273 = vpack.c.bf16 %v2270, %v2269
  %v2274 = vpack.c.bf16 %v2272, %v2271
  %v2276 = vsel %vm118, %v1852, 0
  %v2279 = vsel %vm118, %v1853, 0
  %v2282 = vsel %vm118, %v1854, 0
  %v2285 = vsel %vm118, %v1855, 0
  %2287 = vmatprep.subr.bf16.mxu0 0
  %2288 = vmatpush1.bf16.msra.mxu0 %v2273
  %2289 = vmatprep.subr.bf16.mxu0 0
  %2290 = vmatpush1.bf16.msra.mxu0 %v2274
  %2291 = vmatprep.subr.bf16.mxu0 0
  %2292 = vmatpush1.bf16.msra.mxu0 0
  %2293 = vmatprep.subr.bf16.mxu0 0
  %2294 = vmatpush1.bf16.msra.mxu0 0
  %2295 = vmatprep.subr.bf16.mxu0 0
  %2296 = vmatpush1.bf16.msra.mxu0 0
  %2297 = vmatprep.subr.bf16.mxu0 0
  %2298 = vmatpush1.bf16.msra.mxu0 0
  %2299 = vmatprep.subr.bf16.mxu0 0
  %2300 = vmatpush1.bf16.msra.mxu0 0
  %2301 = vmatprep.subr.bf16.mxu0 0
  %2302 = vmatpush1.bf16.msra.mxu0 0
  %2303 = vmatprep.subr.bf16.mxu0 0
  %2304 = vmatpush1.bf16.msra.mxu0 0
  %2305 = vmatprep.subr.bf16.mxu0 0
  %2306 = vmatpush1.bf16.msra.mxu0 0
  %2307 = vmatprep.subr.bf16.mxu0 0
  %2308 = vmatpush1.bf16.msra.mxu0 0
  %2309 = vmatprep.subr.bf16.mxu0 0
  %2310 = vmatpush1.bf16.msra.mxu0 0
  %2311 = vmatprep.subr.bf16.mxu0 0
  %2312 = vmatpush1.bf16.msra.mxu0 0
  %2313 = vmatprep.subr.bf16.mxu0 0
  %2314 = vmatpush1.bf16.msra.mxu0 0
  %2315 = vmatprep.subr.bf16.mxu0 0
  %2316 = vmatpush1.bf16.msra.mxu0 0
  %2317 = vmatprep.subr.bf16.mxu0 0
  %2318 = vmatpush1.bf16.msra.mxu0 0
  %2319 = vmatprep.mubr.bf16.mxu0 0
  %2320 = vmatmul.mubr.bf16.gmra.mrb[0].mxu0 %v2276
  %v2321 = vpop.f32.mrb[0].mxu0
  %v2322 = vadd.f32 0.0, %v2321
  %v2323 = vpop.f32.mrb[0].mxu0
  %v2324 = vpop.f32.mrb[0].mxu0
  %v2325 = vadd.f32 0.0, %v2324
  %v2326 = vpop.f32.mrb[0].mxu0
  %2327 = vmatprep.mubr.bf16.mxu0 0
  %2328 = vmatmul.mubr.bf16.gmra.mrb[0].mxu0 %v2279
  %v2329 = vpop.f32.mrb[0].mxu0
  %v2330 = vadd.f32 0.0, %v2329
  %v2331 = vpop.f32.mrb[0].mxu0
  %v2332 = vpop.f32.mrb[0].mxu0
  %v2333 = vadd.f32 0.0, %v2332
  %v2334 = vpop.f32.mrb[0].mxu0
  %2335 = vmatprep.mubr.bf16.mxu0 0
  %2336 = vmatmul.mubr.bf16.gmra.mrb[0].mxu0 %v2282
  %v2337 = vpop.f32.mrb[0].mxu0
  %v2338 = vadd.f32 0.0, %v2337
  %v2339 = vpop.f32.mrb[0].mxu0
  %v2340 = vpop.f32.mrb[0].mxu0
  %v2341 = vadd.f32 0.0, %v2340
  %v2342 = vpop.f32.mrb[0].mxu0
  %2343 = vmatprep.mubr.bf16.mxu0 0
  %2344 = vmatmul.mubr.bf16.gmra.mrb[0].mxu0 %v2285
  %v2345 = vpop.f32.mrb[0].mxu0
  %v2346 = vadd.f32 0.0, %v2345
  %v2347 = vpop.f32.mrb[0].mxu0
  %v2348 = vpop.f32.mrb[0].mxu0
  %v2349 = vadd.f32 0.0, %v2348
  %v2350 = vpop.f32.mrb[0].mxu0
  %2351 = vdwg.mxu0
  %v2352 = vpack.c.bf16 %v2079, %v2076
  %v2353 = vpack.c.bf16 %v2087, %v2084
  %v2354 = vpack.c.bf16 %v2095, %v2092
  %v2355 = vpack.c.bf16 %v2103, %v2100
  %v2356 = vpack.c.bf16 %v2325, %v2322
  %v2357 = vpack.c.bf16 %v2333, %v2330
  %v2358 = vpack.c.bf16 %v2341, %v2338
  %v2359 = vpack.c.bf16 %v2349, %v2346
  %v2360 = vld [vmem:[%s8] sm:$0xf]
  %v2361 = vld [vmem:[%s8 + $0x4] sm:$0xf]
  %v2362 = vld [vmem:[%s8 + $0x8] sm:$0xf]
  %v2363 = vld [vmem:[%s8 + $0xc] sm:$0xf]
  %v2364 = vpack.c.bf16 %v1833, %v1832
  %v2365 = vpack.c.bf16 %v1835, %v1834
  %v2366 = vpack.c.bf16 %v1837, %v1836
  %v2367 = vpack.c.bf16 %v1839, %v1838
  %v2368 = vpack.c.bf16 %v1841, %v1840
  %v2369 = vpack.c.bf16 %v1843, %v1842
  %v2370 = vpack.c.bf16 %v1845, %v1844
  %v2371 = vpack.c.bf16 %v1847, %v1846
  %v2372 = vld [vmem:[%s9] sm:$0xf]
  %v2373 = vld [vmem:[%s9 + $0x4] sm:$0xf]
  %2382 = vrot.lane.b32.xlu0 %v2364, 80
  %v2383 = vpop.permute.xlu0 %2382
  %2384 = vrot.lane.b32.xlu0 %v2365, 80
  %v2385 = vpop.permute.xlu0 %2384
  %2386 = vrot.lane.b32.xlu0 %v2366, 80
  %v2387 = vpop.permute.xlu0 %2386
  %2388 = vrot.lane.b32.xlu0 %v2367, 80
  %v2389 = vpop.permute.xlu0 %2388
  %2390 = vrot.lane.b32.xlu0 %v2368, 80
  %v2391 = vpop.permute.xlu0 %2390
  %2392 = vrot.lane.b32.xlu0 %v2369, 80
  %v2393 = vpop.permute.xlu0 %2392
  %2394 = vrot.lane.b32.xlu0 %v2370, 80
  %v2395 = vpop.permute.xlu0 %2394
  %2396 = vrot.lane.b32.xlu0 %v2371, 80
  %v2397 = vpop.permute.xlu0 %2396
  %v2400 = vunpack.c.l.b16 %v2372
  %v2401 = vunpack.c.l.b16 %v2373
  %v2402 = vpack.c.b16 %v2401, %v2400
  %v2405 = vsel %vm693, %v2383, 0
  %v2408 = vsel %vm693, %v2385, 0
  %v2411 = vsel %vm693, %v2387, 0
  %v2414 = vsel %vm693, %v2389, 0
  %v2417 = vsel %vm693, %v2391, 0
  %v2420 = vsel %vm693, %v2393, 0
  %v2423 = vsel %vm693, %v2395, 0
  %v2426 = vsel %vm693, %v2397, 0
  %2428 = vmatprep.subr.bf16.mxu0 0
  %2429 = vmatpush1.bf16.msra.mxu0 %v2402
  %2430 = vmatprep.subr.bf16.mxu0 0
  %2431 = vmatpush1.bf16.msra.mxu0 0
  %2432 = vmatprep.subr.bf16.mxu0 0
  %2433 = vmatpush1.bf16.msra.mxu0 0
  %2434 = vmatprep.subr.bf16.mxu0 0
  %2435 = vmatpush1.bf16.msra.mxu0 0
  %2436 = vmatprep.subr.bf16.mxu0 0
  %2437 = vmatpush1.bf16.msra.mxu0 0
  %2438 = vmatprep.subr.bf16.mxu0 0
  %2439 = vmatpush1.bf16.msra.mxu0 0
  %2440 = vmatprep.subr.bf16.mxu0 0
  %2441 = vmatpush1.bf16.msra.mxu0 0
  %2442 = vmatprep.subr.bf16.mxu0 0
  %2443 = vmatpush1.bf16.msra.mxu0 0
  %2444 = vmatprep.subr.bf16.mxu0 0
  %2445 = vmatpush1.bf16.msra.mxu0 0
  %2446 = vmatprep.subr.bf16.mxu0 0
  %2447 = vmatpush1.bf16.msra.mxu0 0
  %2448 = vmatprep.subr.bf16.mxu0 0
  %2449 = vmatpush1.bf16.msra.mxu0 0
  %2450 = vmatprep.subr.bf16.mxu0 0
  %2451 = vmatpush1.bf16.msra.mxu0 0
  %2452 = vmatprep.subr.bf16.mxu0 0
  %2453 = vmatpush1.bf16.msra.mxu0 0
  %2454 = vmatprep.subr.bf16.mxu0 0
  %2455 = vmatpush1.bf16.msra.mxu0 0
  %2456 = vmatprep.subr.bf16.mxu0 0
  %2457 = vmatpush1.bf16.msra.mxu0 0
  %2458 = vmatprep.subr.bf16.mxu0 0
  %2459 = vmatpush1.bf16.msra.mxu0 0
  %2460 = vmatprep.mubr.bf16.mxu0 0
  %2461 = vmatmul.mubr.bf16.gmra.mrb[0].mxu0 %v2405
  %v2462 = vpop.f32.mrb[0].mxu0
  %v2463 = vadd.f32 0.0, %v2462
  %v2464 = vpop.f32.mrb[0].mxu0
  %v2465 = vpop.f32.mrb[0].mxu0
  %v2466 = vadd.f32 0.0, %v2465
  %v2467 = vpop.f32.mrb[0].mxu0
  %2468 = vmatprep.mubr.bf16.mxu0 0
  %2469 = vmatmul.mubr.bf16.gmra.mrb[0].mxu0 %v2408
  %v2470 = vpop.f32.mrb[0].mxu0
  %v2471 = vadd.f32 0.0, %v2470
  %v2472 = vpop.f32.mrb[0].mxu0
  %v2473 = vpop.f32.mrb[0].mxu0
  %v2474 = vadd.f32 0.0, %v2473
  %v2475 = vpop.f32.mrb[0].mxu0
  %2476 = vmatprep.mubr.bf16.mxu0 0
  %2477 = vmatmul.mubr.bf16.gmra.mrb[0].mxu0 %v2411
  %v2478 = vpop.f32.mrb[0].mxu0
  %v2479 = vadd.f32 0.0, %v2478
  %v2480 = vpop.f32.mrb[0].mxu0
  %v2481 = vpop.f32.mrb[0].mxu0
  %v2482 = vadd.f32 0.0, %v2481
  %v2483 = vpop.f32.mrb[0].mxu0
  %2484 = vmatprep.mubr.bf16.mxu0 0
  %2485 = vmatmul.mubr.bf16.gmra.mrb[0].mxu0 %v2414
  %v2486 = vpop.f32.mrb[0].mxu0
  %v2487 = vadd.f32 0.0, %v2486
  %v2488 = vpop.f32.mrb[0].mxu0
  %v2489 = vpop.f32.mrb[0].mxu0
  %v2490 = vadd.f32 0.0, %v2489
  %v2491 = vpop.f32.mrb[0].mxu0
  %2492 = vmatprep.mubr.bf16.mxu0 0
  %2493 = vmatmul.mubr.bf16.gmra.mrb[0].mxu0 %v2417
  %v2494 = vpop.f32.mrb[0].mxu0
  %v2495 = vadd.f32 0.0, %v2494
  %v2496 = vpop.f32.mrb[0].mxu0
  %v2497 = vpop.f32.mrb[0].mxu0
  %v2498 = vadd.f32 0.0, %v2497
  %v2499 = vpop.f32.mrb[0].mxu0
  %2500 = vmatprep.mubr.bf16.mxu0 0
  %2501 = vmatmul.mubr.bf16.gmra.mrb[0].mxu0 %v2420
  %v2502 = vpop.f32.mrb[0].mxu0
  %v2503 = vadd.f32 0.0, %v2502
  %v2504 = vpop.f32.mrb[0].mxu0
  %v2505 = vpop.f32.mrb[0].mxu0
  %v2506 = vadd.f32 0.0, %v2505
  %v2507 = vpop.f32.mrb[0].mxu0
  %2508 = vmatprep.mubr.bf16.mxu0 0
  %2509 = vmatmul.mubr.bf16.gmra.mrb[0].mxu0 %v2423
  %v2510 = vpop.f32.mrb[0].mxu0
  %v2511 = vadd.f32 0.0, %v2510
  %v2512 = vpop.f32.mrb[0].mxu0
  %v2513 = vpop.f32.mrb[0].mxu0
  %v2514 = vadd.f32 0.0, %v2513
  %v2515 = vpop.f32.mrb[0].mxu0
  %2516 = vmatprep.mubr.bf16.mxu0 0
  %2517 = vmatmul.mubr.bf16.gmra.mrb[0].mxu0 %v2426
  %v2518 = vpop.f32.mrb[0].mxu0
  %v2519 = vadd.f32 0.0, %v2518
  %v2520 = vpop.f32.mrb[0].mxu0
  %v2521 = vpop.f32.mrb[0].mxu0
  %v2522 = vadd.f32 0.0, %v2521
  %v2523 = vpop.f32.mrb[0].mxu0
  %2524 = vdwg.mxu0
  %v2529 = vunpack.c.l.b16 %v2360
  %v2530 = vunpack.c.l.b16 %v2361
  %v2531 = vunpack.c.l.b16 %v2362
  %v2532 = vunpack.c.l.b16 %v2363
  %v2533 = vpack.c.b16 %v2530, %v2529
  %v2534 = vpack.c.b16 %v2532, %v2531
  %v2538 = vsel %vm118, %v2352, 0
  %v2541 = vsel %vm118, %v2353, 0
  %v2544 = vsel %vm118, %v2354, 0
  %v2547 = vsel %vm118, %v2355, 0
  %v2550 = vsel %vm118, %v2356, 0
  %v2553 = vsel %vm118, %v2357, 0
  %v2556 = vsel %vm118, %v2358, 0
  %v2559 = vsel %vm118, %v2359, 0
  %2561 = vmatprep.subr.bf16.mxu0 0
  %2562 = vmatpush1.bf16.msra.mxu0 %v2533
  %2563 = vmatprep.subr.bf16.mxu0 0
  %2564 = vmatpush1.bf16.msra.mxu0 %v2534
  %2565 = vmatprep.subr.bf16.mxu0 0
  %2566 = vmatpush1.bf16.msra.mxu0 0
  %2567 = vmatprep.subr.bf16.mxu0 0
  %2568 = vmatpush1.bf16.msra.mxu0 0
  %2569 = vmatprep.subr.bf16.mxu0 0
  %2570 = vmatpush1.bf16.msra.mxu0 0
  %2571 = vmatprep.subr.bf16.mxu0 0
  %2572 = vmatpush1.bf16.msra.mxu0 0
  %2573 = vmatprep.subr.bf16.mxu0 0
  %2574 = vmatpush1.bf16.msra.mxu0 0
  %2575 = vmatprep.subr.bf16.mxu0 0
  %2576 = vmatpush1.bf16.msra.mxu0 0
  %2577 = vmatprep.subr.bf16.mxu0 0
  %2578 = vmatpush1.bf16.msra.mxu0 0
  %2579 = vmatprep.subr.bf16.mxu0 0
  %2580 = vmatpush1.bf16.msra.mxu0 0
  %2581 = vmatprep.subr.bf16.mxu0 0
  %2582 = vmatpush1.bf16.msra.mxu0 0
  %2583 = vmatprep.subr.bf16.mxu0 0
  %2584 = vmatpush1.bf16.msra.mxu0 0
  %2585 = vmatprep.subr.bf16.mxu0 0
  %2586 = vmatpush1.bf16.msra.mxu0 0
  %2587 = vmatprep.subr.bf16.mxu0 0
  %2588 = vmatpush1.bf16.msra.mxu0 0
  %2589 = vmatprep.subr.bf16.mxu0 0
  %2590 = vmatpush1.bf16.msra.mxu0 0
  %2591 = vmatprep.subr.bf16.mxu0 0
  %2592 = vmatpush1.bf16.msra.mxu0 0
  %2593 = vmatprep.mubr.bf16.mxu0 0
  %2594 = vmatmul.mubr.bf16.gmra.mrb[0].mxu0 %v2538
  %v2595 = vpop.f32.mrb[0].mxu0
  %v2596 = vadd.f32 %v2463, %v2595
  %v2597 = vpop.f32.mrb[0].mxu0
  %v2598 = vpop.f32.mrb[0].mxu0
  %v2599 = vadd.f32 %v2466, %v2598
  %v2600 = vpop.f32.mrb[0].mxu0
  %2601 = vmatprep.mubr.bf16.mxu0 0
  %2602 = vmatmul.mubr.bf16.gmra.mrb[0].mxu0 %v2541
  %v2603 = vpop.f32.mrb[0].mxu0
  %v2604 = vadd.f32 %v2471, %v2603
  %v2605 = vpop.f32.mrb[0].mxu0
  %v2606 = vpop.f32.mrb[0].mxu0
  %v2607 = vadd.f32 %v2474, %v2606
  %v2608 = vpop.f32.mrb[0].mxu0
  %2609 = vmatprep.mubr.bf16.mxu0 0
  %2610 = vmatmul.mubr.bf16.gmra.mrb[0].mxu0 %v2544
  %v2611 = vpop.f32.mrb[0].mxu0
  %v2612 = vadd.f32 %v2479, %v2611
  %v2613 = vpop.f32.mrb[0].mxu0
  %v2614 = vpop.f32.mrb[0].mxu0
  %v2615 = vadd.f32 %v2482, %v2614
  %v2616 = vpop.f32.mrb[0].mxu0
  %2617 = vmatprep.mubr.bf16.mxu0 0
  %2618 = vmatmul.mubr.bf16.gmra.mrb[0].mxu0 %v2547
  %v2619 = vpop.f32.mrb[0].mxu0
  %v2620 = vadd.f32 %v2487, %v2619
  %v2621 = vpop.f32.mrb[0].mxu0
  %v2622 = vpop.f32.mrb[0].mxu0
  %v2623 = vadd.f32 %v2490, %v2622
  %v2624 = vpop.f32.mrb[0].mxu0
  %2625 = vmatprep.mubr.bf16.mxu0 0
  %2626 = vmatmul.mubr.bf16.gmra.mrb[0].mxu0 %v2550
  %v2627 = vpop.f32.mrb[0].mxu0
  %v2628 = vadd.f32 %v2495, %v2627
  %v2629 = vpop.f32.mrb[0].mxu0
  %v2630 = vpop.f32.mrb[0].mxu0
  %v2631 = vadd.f32 %v2498, %v2630
  %v2632 = vpop.f32.mrb[0].mxu0
  %2633 = vmatprep.mubr.bf16.mxu0 0
  %2634 = vmatmul.mubr.bf16.gmra.mrb[0].mxu0 %v2553
  %v2635 = vpop.f32.mrb[0].mxu0
  %v2636 = vadd.f32 %v2503, %v2635
  %v2637 = vpop.f32.mrb[0].mxu0
  %v2638 = vpop.f32.mrb[0].mxu0
  %v2639 = vadd.f32 %v2506, %v2638
  %v2640 = vpop.f32.mrb[0].mxu0
  %2641 = vmatprep.mubr.bf16.mxu0 0
  %2642 = vmatmul.mubr.bf16.gmra.mrb[0].mxu0 %v2556
  %v2643 = vpop.f32.mrb[0].mxu0
  %v2644 = vadd.f32 %v2511, %v2643
  %v2645 = vpop.f32.mrb[0].mxu0
  %v2646 = vpop.f32.mrb[0].mxu0
  %v2647 = vadd.f32 %v2514, %v2646
  %v2648 = vpop.f32.mrb[0].mxu0
  %2649 = vmatprep.mubr.bf16.mxu0 0
  %2650 = vmatmul.mubr.bf16.gmra.mrb[0].mxu0 %v2559
  %v2651 = vpop.f32.mrb[0].mxu0
  %v2652 = vadd.f32 %v2519, %v2651
  %v2653 = vpop.f32.mrb[0].mxu0
  %v2654 = vpop.f32.mrb[0].mxu0
  %v2655 = vadd.f32 %v2522, %v2654
  %v2656 = vpop.f32.mrb[0].mxu0
  %2657 = vdwg.mxu0
  %v2658 = vld [vmem:[%s10] sm:$0x1]
  %v2660 = vlaneseq
  %v2661 = vshrl.u32 %v2660, 7
  %v2662 = vsub.s32 0, %v2661
  %v2663 = vrot.slane %v2658, %v2662
  %v2665 = vadd.f32 %v2596, %v2663
  %v2666 = vadd.f32 %v2599, %v2663
  %v2667 = vadd.f32 %v2604, %v2663
  %v2668 = vadd.f32 %v2607, %v2663
  %v2669 = vadd.f32 %v2612, %v2663
  %v2670 = vadd.f32 %v2615, %v2663
  %v2671 = vadd.f32 %v2620, %v2663
  %v2672 = vadd.f32 %v2623, %v2663
  %v2673 = vadd.f32 %v2628, %v2663
  %v2674 = vadd.f32 %v2631, %v2663
  %v2675 = vadd.f32 %v2636, %v2663
  %v2676 = vadd.f32 %v2639, %v2663
  %v2677 = vadd.f32 %v2644, %v2663
  %v2678 = vadd.f32 %v2647, %v2663
  %v2679 = vadd.f32 %v2652, %v2663
  %v2680 = vadd.f32 %v2655, %v2663
  %2681 = vst.msk [vmem:[%s11] sm:$0xff] %vm118, %v2665
  %2682 = vst.msk [vmem:[%s11 + $0x8] sm:$0xff] %vm118, %v2666
  %2683 = vst.msk [vmem:[%s11 + $0x10] sm:$0xff] %vm118, %v2667
  %2684 = vst.msk [vmem:[%s11 + $0x18] sm:$0xff] %vm118, %v2668
  %2685 = vst.msk [vmem:[%s11 + $0x20] sm:$0xff] %vm118, %v2669
  %2686 = vst.msk [vmem:[%s11 + $0x28] sm:$0xff] %vm118, %v2670
  %2687 = vst.msk [vmem:[%s11 + $0x30] sm:$0xff] %vm118, %v2671
  %2688 = vst.msk [vmem:[%s11 + $0x38] sm:$0xff] %vm118, %v2672
  %2689 = vst.msk [vmem:[%s11 + $0x40] sm:$0xff] %vm118, %v2673
  %2690 = vst.msk [vmem:[%s11 + $0x48] sm:$0xff] %vm118, %v2674
  %2691 = vst.msk [vmem:[%s11 + $0x50] sm:$0xff] %vm118, %v2675
  %2692 = vst.msk [vmem:[%s11 + $0x58] sm:$0xff] %vm118, %v2676
  %2693 = vst.msk [vmem:[%s11 + $0x60] sm:$0xff] %vm118, %v2677
  %2694 = vst.msk [vmem:[%s11 + $0x68] sm:$0xff] %vm118, %v2678
  %2695 = vst.msk [vmem:[%s11 + $0x70] sm:$0xff] %vm118, %v2679
  %2696 = vst.msk [vmem:[%s11 + $0x78] sm:$0xff] %vm118, %v2680
  // Predicated region
  $region46: #{tpu_custom_call.1} parent=0 // pred_check
    _
  $region47: #{tpu_custom_call.1} parent=0 // pred_check_branch
    %2698 = sbr.rel (0) target = $region49
  $region48: #{tpu_custom_call.1} parent=0 // pred_region
    _
  $region49: #{tpu_custom_call.1} parent=0 // pred_fallthru
    _
  // Predicated region
  $region50: #{tpu_custom_call.1} parent=0 // pred_check
    _
  $region51: #{tpu_custom_call.1} parent=0 // pred_check_branch
    %2700 = sbr.rel (0) target = $region53
  $region52: #{tpu_custom_call.1} parent=0 // pred_region
    _
  $region53: #{tpu_custom_call.1} parent=0 // pred_fallthru
    _

</llo_original>
